<compile_context>
chip_gen: v7x
topology: tpu7x:2x2x1
jax: 0.10.0
libtpu: 0.0.40
codegen_flags: <defaults>
</compile_context>

<pallas_src>
import numpy as np
import jax
import jax.numpy as jnp
from jax import lax
from jax.experimental import pallas as pl
from jax.experimental.pallas import tpu as pltpu


def _round_up(x, m):
    return ((x + m - 1) // m) * m


def _vmem_limit_bytes():
    """~85% of physical VMEM (v5e/v6e: ~108 MiB, v7x: ~54 MiB); safe fallback ~54 MiB."""
    cap = 64 * 2 ** 20
    try:
        cap = int(pltpu.get_tpu_info().vmem_capacity_bytes)
    except Exception:
        pass
    return max(32 * 2 ** 20, int(cap * 0.85))


# ----------------------------- recurrent Pallas kernel ---------------------------------
def _decoder_step_kernel(
    tmax_ref,                                    # SMEM scalar prefetch: per-b-tile max decode len
    att1_ref, feat_ref, embg_ref, lens_ref, pixm_ref, h0_ref, c0_ref,
    whcat_ref, watt_ref, bfb_ref, wiha_ref,
    h_out_ref, alpha_ref,
    h_scr, c_scr,
):
    b = pl.program_id(0)
    t = pl.program_id(1)

    # initialize recurrent state from h_fc / c_fc outputs at the first decode step
    @pl.when(t == 0)
    def _():
        h_scr[...] = h0_ref[...]
        c_scr[...] = c0_ref[...]

    tile_active = t < tmax_ref[b]

    @pl.when(tile_active)
    def _():
        bt, L = h0_ref.shape
        A = watt_ref.shape[1]
        E = bfb_ref.shape[1]
        L4 = 4 * L

        h = h_scr[...]                                   # (bt, L) f32
        c = c_scr[...]
        h_bf = h.astype(jnp.bfloat16)

        # fused h-side projection: [W_hh | decoder_fc | f_beta] in ONE MXU matmul
        hz = jnp.dot(h_bf, whcat_ref[...], preferred_element_type=jnp.float32)  # (bt, 4L+A+E)
        gates_h = hz[:, :L4]                             # LSTM W_hh @ h
        att2 = hz[:, L4:L4 + A]                          # decoder_fc(h) (bias folded into att1)
        gate_pre = hz[:, L4 + A:L4 + A + E]              # f_beta(h) pre-activation (bias added below)

        # ---------------- Attention (att1 = encoder_fc(features), transposed, precomputed) ----
        # relu in f32; A-reduction on the MXU with P landing on the lane axis.
        e_t = jnp.maximum(att1_ref[...].astype(jnp.float32) + att2[:, :, None], 0.0)  # (bt, A, Pp)
        w_b = jnp.broadcast_to(watt_ref[...], (bt, 1, A))                              # bf16
        scores = jnp.einsum('bka,bap->bkp', w_b, e_t.astype(jnp.bfloat16),
                            preferred_element_type=jnp.float32)                       # (bt, 1, Pp)
        att = scores[:, 0, :] + pixm_ref[...]            # att_fc bias + (-inf) pad mask folded in
        att = att - jnp.max(att, axis=1, keepdims=True)
        p = jnp.exp(att)
        inv = pl.reciprocal(jnp.sum(p, axis=1, keepdims=True), approx=True)
        alpha = p * inv                                                                # (bt, Pp)

        # attention-weighted encoding as a batched MXU matvec
        awe = jnp.einsum('bqp,bpe->bqe', alpha[:, None, :].astype(jnp.bfloat16),
                         feat_ref[...], preferred_element_type=jnp.float32)[:, 0, :]   # (bt, E)

        # ---------------- Gate ----------------
        gate = jax.nn.sigmoid(gate_pre + bfb_ref[...])
        awe = gate * awe

        # ---------------- LSTMCell (embedding contribution + both biases precomputed) ------
        gates = (embg_ref[0] + gates_h
                 + jnp.dot(awe.astype(jnp.bfloat16), wiha_ref[...],
                           preferred_element_type=jnp.float32))
        i_g = jax.nn.sigmoid(gates[:, 0 * L:1 * L])
        f_g = jax.nn.sigmoid(gates[:, 1 * L:2 * L])
        g_g = jnp.tanh(gates[:, 2 * L:3 * L])
        o_g = jax.nn.sigmoid(gates[:, 3 * L:4 * L])
        c_new = f_g * c + i_g * g_g
        h_new = o_g * jnp.tanh(c_new)

        # rows whose caption is finished keep their last state (shrinking-batch semantics)
        active = lens_ref[...] > t                       # (bt, 1) bool
        h_upd = jnp.where(active, h_new, h)
        c_upd = jnp.where(active, c_new, c)
        h_scr[...] = h_upd
        c_scr[...] = c_upd
        h_out_ref[0] = h_upd
        alpha_ref[0] = jnp.where(active, alpha, 0.0)

    @pl.when(jnp.logical_not(tile_active))
    def _():
        # every caption in this batch tile already finished at step t: skip all compute
        h_out_ref[0] = h_scr[...]
        alpha_ref[0] = jnp.zeros(alpha_ref.shape[1:], alpha_ref.dtype)


# ----------------------------- classifier Pallas kernel ---------------------------------
def _classifier_kernel(h_ref, mask_ref, w_ref, b_ref, y_ref):
    # h_ref: (tt*Bp, L) f32, mask_ref: (tt*Bp, 1) f32, w_ref: (L, vt) bf16, b_ref: (1, vt) f32
    y = jnp.dot(h_ref[...].astype(jnp.bfloat16), w_ref[...],
                preferred_element_type=jnp.float32) + b_ref[...]
    y_ref[...] = y * mask_ref[...]


# ----------------------------- wrapper (glue) ---------------------------------
def decoder_forward(params, features, captions, lengths):
    """features: (B, H, W, E) f32; captions: (B, max_len) int32; lengths: numpy int (B,), sorted desc."""
    B, Hs, Ws, E = features.shape
    P = Hs * Ws
    feats = features.reshape(B, P, E).astype(jnp.float32)

    # glue: embedding lookup + initial hidden/cell from mean features
    emb_all = params["emb"][captions]                                  # (B, max_len, EMB)
    mean_f = feats.mean(axis=1)                                        # (B, E)
    h0 = mean_f @ params["h_fc_w"].T + params["h_fc_b"]                # (B, L)
    c0 = mean_f @ params["c_fc_w"].T + params["c_fc_b"]                # (B, L)

    dec_lens = np.asarray(lengths).astype(np.int32) - 1
    T = int(dec_lens.max())
    EMB = emb_all.shape[-1]
    L = h0.shape[-1]
    V = params["cls_w"].shape[0]
    A = params["att_enc_w"].shape[0]

    Pp = _round_up(P, 128)                    # lane-dense pixel axis
    Vp = _round_up(V, 128)                    # lane-dense vocab axis
    Bp = _round_up(B, 8)                      # sublane-dense batch

    # ---- generation-aware VMEM budget and batch-tile sizing (MXU M dimension) ----
    vmem_limit = _vmem_limit_bytes()
    bytes_per_row = (4 * Pp * (A + E)         # att1^T + features, bf16, double-buffered
                     + 6 * Pp * A             # in-kernel relu temp (f32 + bf16 copy)
                     + 16 * Pp                # scores / att / alpha temps + alpha out block
                     + 64 * L)                # embg / gates / h / c / h-out blocks
    bt = min(128, Bp, max(8, ((vmem_limit // 2) // max(bytes_per_row, 1)) // 8 * 8))
    Bp = _round_up(Bp, bt)
    nb = Bp // bt

    bf16 = jnp.bfloat16

    feats_p = jnp.zeros((Bp, Pp, E), jnp.float32).at[:B, :P, :].set(feats)
    feats_bf = feats_p.astype(bf16)

    # hoisted t-invariant attention projection, TRANSPOSED to (B, A, P) and stored bf16;
    # decoder_fc bias folded in so the kernel only adds decoder_fc(h) weights' output.
    att1_t = (jnp.einsum('bpe,ae->bap', feats_p, params["att_enc_w"])
              + (params["att_enc_b"] + params["att_dec_b"])[None, :, None]).astype(bf16)

    h0_p = jnp.zeros((Bp, L), jnp.float32).at[:B].set(h0)
    c0_p = jnp.zeros((Bp, L), jnp.float32).at[:B].set(c0)

    lens_vec = np.zeros((Bp,), np.int32)
    lens_vec[:B] = dec_lens
    lens_p = jnp.asarray(lens_vec).reshape(Bp, 1)
    tile_max = jnp.asarray(lens_vec.reshape(nb, bt).max(axis=1).astype(np.int32))  # (nb,)

    # att_fc bias + (-inf) mask for padded pixels, folded into one additive row
    pixm = (params["att_b"][0]
            + jnp.where(jnp.arange(Pp) < P, 0.0, -1e30)).astype(jnp.float32).reshape(1, Pp)

    # hoisted embedding contribution to the LSTM gates (both LSTM biases folded in)
    wih = params["lstm_wih"]                                                     # (4L, EMB+E)
    emb_seq = jnp.transpose(emb_all[:, :T, :], (1, 0, 2)).astype(jnp.float32)    # (T, B, EMB)
    embg = (jnp.einsum('tbm,gm->tbg', emb_seq, wih[:, :EMB])
            + params["lstm_bih"] + params["lstm_bhh"])                           # (T, B, 4L)
    embg_p = jnp.zeros((T, Bp, 4 * L), jnp.float32).at[:, :B, :].set(embg)

    # fused h-side weight [W_hh | decoder_fc | f_beta] -> (L, 4L + A + E), bf16
    whcat = jnp.concatenate([params["lstm_whh"].T, params["att_dec_w"].T,
                             params["f_beta_w"].T], axis=1).astype(bf16)
    watt = params["att_w"].astype(bf16)                        # (1, A)
    bfb = params["f_beta_b"].reshape(1, E).astype(jnp.float32)
    wiha = wih[:, EMB:].T.astype(bf16)                         # (E, 4L)

    def _full(arr):
        nd = arr.ndim
        return pl.BlockSpec(arr.shape, lambda b, t, tm, _nd=nd: (0,) * _nd)

    grid_spec = pltpu.PrefetchScalarGridSpec(
        num_scalar_prefetch=1,
        grid=(nb, T),
        in_specs=[
            pl.BlockSpec((bt, A, Pp), lambda b, t, tm: (b, 0, 0)),      # att1^T, bf16 (t-invariant)
            pl.BlockSpec((bt, Pp, E), lambda b, t, tm: (b, 0, 0)),      # features, bf16 (t-invariant)
            pl.BlockSpec((1, bt, 4 * L), lambda b, t, tm: (t, b, 0)),   # per-step precomputed gates
            pl.BlockSpec((bt, 1), lambda b, t, tm: (b, 0)),             # decoder lengths
            _full(pixm),
            pl.BlockSpec((bt, L), lambda b, t, tm: (b, 0)),             # h0
            pl.BlockSpec((bt, L), lambda b, t, tm: (b, 0)),             # c0
            _full(whcat), _full(watt), _full(bfb), _full(wiha),
        ],
        out_specs=[
            pl.BlockSpec((1, bt, L), lambda b, t, tm: (t, b, 0)),       # hidden states
            pl.BlockSpec((1, bt, Pp), lambda b, t, tm: (t, b, 0)),      # attention weights
        ],
        scratch_shapes=[
            pltpu.VMEM((bt, L), jnp.float32),   # hidden state carry
            pltpu.VMEM((bt, L), jnp.float32),   # cell state carry
        ],
    )

    h_all, alpha_all = pl.pallas_call(
        _decoder_step_kernel,
        grid_spec=grid_spec,
        out_shape=[
            jax.ShapeDtypeStruct((T, Bp, L), jnp.float32),
            jax.ShapeDtypeStruct((T, Bp, Pp), jnp.float32),
        ],
        compiler_params=pltpu.CompilerParams(
            dimension_semantics=("parallel", "arbitrary"),
            vmem_limit_bytes=vmem_limit),
    )(tile_max, att1_t, feats_bf, embg_p, lens_p, pixm, h0_p, c0_p,
      whcat, watt, bfb, wiha)

    # ------------- classifier: multiple time steps per grid step + vocab tiling -------------
    tt = max(1, min(8, T))
    Tp = _round_up(T, tt)
    vt = min(Vp, 2048)
    Vp = _round_up(Vp, vt)

    h_flat = jnp.zeros((Tp, Bp, L), jnp.float32).at[:T].set(h_all).reshape(Tp * Bp, L)
    step_mask = (jnp.arange(Tp)[:, None] < jnp.asarray(lens_vec)[None, :]
                 ).astype(jnp.float32).reshape(Tp * Bp, 1)
    wcls = jnp.zeros((L, Vp), bf16).at[:, :V].set(params["cls_w"].T.astype(bf16))
    bcls = jnp.zeros((1, Vp), jnp.float32).at[:, :V].set(params["cls_b"].reshape(1, V))

    # TODO(synk): logits could be emitted bf16 to halve HBM writeback if downstream tolerates it.
    y_all = pl.pallas_call(
        _classifier_kernel,
        grid=(Tp // tt, Vp // vt),
        in_specs=[
            pl.BlockSpec((tt * Bp, L), lambda tb, vb: (tb, 0)),
            pl.BlockSpec((tt * Bp, 1), lambda tb, vb: (tb, 0)),
            pl.BlockSpec((L, vt), lambda tb, vb: (0, vb)),
            pl.BlockSpec((1, vt), lambda tb, vb: (0, vb)),
        ],
        out_specs=pl.BlockSpec((tt * Bp, vt), lambda tb, vb: (tb, vb)),
        out_shape=jax.ShapeDtypeStruct((Tp * Bp, Vp), jnp.float32),
        compiler_params=pltpu.CompilerParams(
            dimension_semantics=("parallel", "parallel"),
            vmem_limit_bytes=vmem_limit),
    )(h_flat, step_mask, wcls, bcls)

    y3 = y_all.reshape(Tp, Bp, Vp)
    y_predicted = jnp.transpose(y3[:T, :B, :V], (1, 0, 2))       # (B, T, V)
    alphas = jnp.transpose(alpha_all[:, :B, :P], (1, 0, 2))      # (B, T, P)
    decoder_lengths = [int(l) - 1 for l in np.asarray(lengths)]
    return y_predicted, captions, decoder_lengths, alphas


# ----------------------------- pure-JAX reference ---------------------------------
def reference_forward(params, features, captions, lengths):
    B, Hs, Ws, E = features.shape
    feats = features.reshape(B, Hs * Ws, E).astype(jnp.float32)
    emb_all = params["emb"][captions]
    mean_f = feats.mean(axis=1)
    h = mean_f @ params["h_fc_w"].T + params["h_fc_b"]
    c = mean_f @ params["c_fc_w"].T + params["c_fc_b"]
    dec_lens = np.asarray(lengths) - 1
    T = int(dec_lens.max())
    L = h.shape[-1]
    ys, als = [], []
    for t in range(T):
        att1 = feats @ params["att_enc_w"].T + params["att_enc_b"]
        att2 = h @ params["att_dec_w"].T + params["att_dec_b"]
        e = jnp.maximum(att1 + att2[:, None, :], 0.0)
        att = (e @ params["att_w"].T)[..., 0] + params["att_b"][0]
        alpha = jax.nn.softmax(att, axis=1)
        awe = jnp.sum(alpha[:, :, None] * feats, axis=1)
        gate = jax.nn.sigmoid(h @ params["f_beta_w"].T + params["f_beta_b"])
        awe = gate * awe
        x = jnp.concatenate([emb_all[:, t, :], awe], axis=1)
        gates = x @ params["lstm_wih"].T + params["lstm_bih"] + h @ params["lstm_whh"].T + params["lstm_bhh"]
        i = jax.nn.sigmoid(gates[:, :L]); f = jax.nn.sigmoid(gates[:, L:2 * L])
        g = jnp.tanh(gates[:, 2 * L:3 * L]); o = jax.nn.sigmoid(gates[:, 3 * L:])
        c_new = f * c + i * g
        h_new = o * jnp.tanh(c_new)
        y = h_new @ params["cls_w"].T + params["cls_b"]
        m = jnp.asarray((dec_lens > t).astype(np.float32))[:, None]
        ys.append(jnp.where(m > 0, y, 0.0))
        als.append(jnp.where(m > 0, alpha, 0.0))
        h = jnp.where(m > 0, h_new, h)
        c = jnp.where(m > 0, c_new, c)
    return jnp.stack(ys, axis=1), jnp.stack(als, axis=1)


# ----------------------------- param init ---------------------------------
def _linear(key, out_dim, in_dim):
    k1, k2 = jax.random.split(key)
    bound = 1.0 / np.sqrt(in_dim)
    w = jax.random.uniform(k1, (out_dim, in_dim), jnp.float32, -bound, bound)
    b = jax.random.uniform(k2, (out_dim,), jnp.float32, -bound, bound)
    return w, b


def init_params(key, attention_dim, embedding_size, lstm_size, vocab_size, encoder_dim):
    ks = jax.random.split(key, 10)
    p = {}
    p["emb"] = 0.1 * jax.random.normal(ks[0], (vocab_size, embedding_size), jnp.float32)
    p["h_fc_w"], p["h_fc_b"] = _linear(ks[1], lstm_size, encoder_dim)
    p["c_fc_w"], p["c_fc_b"] = _linear(ks[2], lstm_size, encoder_dim)
    p["f_beta_w"], p["f_beta_b"] = _linear(ks[3], encoder_dim, lstm_size)
    p["cls_w"], p["cls_b"] = _linear(ks[4], vocab_size, lstm_size)
    p["att_enc_w"], p["att_enc_b"] = _linear(ks[5], attention_dim, encoder_dim)
    p["att_dec_w"], p["att_dec_b"] = _linear(ks[6], attention_dim, lstm_size)
    p["att_w"], p["att_b"] = _linear(ks[7], 1, attention_dim)
    p["lstm_wih"], p["lstm_bih"] = _linear(ks[8], 4 * lstm_size, encoder_dim + embedding_size)
    p["lstm_whh"], p["lstm_bhh"] = _linear(ks[9], 4 * lstm_size, lstm_size)
    return p


# ----------------------------- main ---------------------------------
if __name__ == "__main__":
    # small synthetic config (encoder_dim shrunk from 2048 for a quick test)
    B, ENC_IMG, ENC_DIM = 4, 4, 32
    EMB_SIZE, LSTM_SIZE, ATT_DIM, VOCAB = 16, 32, 32, 64
    MAX_LEN = 8

    key = jax.random.PRNGKey(0)
    kp, kf, kc = jax.random.split(key, 3)

    params = init_params(kp, ATT_DIM, EMB_SIZE, LSTM_SIZE, VOCAB, ENC_DIM)
    features = jax.random.normal(kf, (B, ENC_IMG, ENC_IMG, ENC_DIM), jnp.float32)
    captions = jax.random.randint(kc, (B, MAX_LEN), 0, VOCAB, dtype=jnp.int32)
    lengths = np.array([8, 7, 6, 5], dtype=np.int32)  # sorted descending, as the PyTorch loop assumes

    y_pred, caps_out, dec_lens, alphas = decoder_forward(params, features, captions, lengths)
    y_pred = jax.block_until_ready(y_pred)
    alphas = jax.block_until_ready(alphas)

    # sanity checks vs pure-JAX f32 reference (kernel uses bf16 matmul operands, f32 accumulation)
    y_ref, a_ref = reference_forward(params, features, captions, lengths)
    T = int(max(dec_lens))
    assert y_pred.shape == (B, T, VOCAB)
    assert alphas.shape == (B, T, ENC_IMG * ENC_IMG)
    assert bool(jnp.all(jnp.isfinite(y_pred))) and bool(jnp.all(jnp.isfinite(alphas)))
    np.testing.assert_allclose(np.asarray(y_pred), np.asarray(y_ref), rtol=5e-2, atol=5e-2)
    np.testing.assert_allclose(np.asarray(alphas), np.asarray(a_ref), rtol=5e-2, atol=5e-2)

    print("KERNEL_OK")
</pallas_src>

<mosaic_0001>
module attributes {stable_mosaic.version = 11 : i64} {
  func.func @_decoder_step_kernel(%arg0: i32, %arg1: i32, %arg2: memref<1xi32, #tpu.memory_space<smem>>, %arg3: memref<8x32x128xbf16, #tpu.memory_space<vmem>>, %arg4: memref<8x128x32xbf16, #tpu.memory_space<vmem>>, %arg5: memref<1x8x128xf32, #tpu.memory_space<vmem>>, %arg6: memref<8x1xi32, #tpu.memory_space<vmem>>, %arg7: memref<1x128xf32, #tpu.memory_space<vmem>>, %arg8: memref<8x32xf32, #tpu.memory_space<vmem>>, %arg9: memref<8x32xf32, #tpu.memory_space<vmem>>, %arg10: memref<32x192xbf16, #tpu.memory_space<vmem>>, %arg11: memref<1x32xbf16, #tpu.memory_space<vmem>>, %arg12: memref<1x32xf32, #tpu.memory_space<vmem>>, %arg13: memref<32x128xbf16, #tpu.memory_space<vmem>>, %arg14: memref<1x8x32xf32, #tpu.memory_space<vmem>>, %arg15: memref<1x8x128xf32, #tpu.memory_space<vmem>>, %arg16: memref<8x32xf32, #tpu.memory_space<vmem>>, %arg17: memref<8x32xf32, #tpu.memory_space<vmem>>) attributes {dimension_semantics = [#tpu.dimension_semantics<parallel>, #tpu.dimension_semantics<arbitrary>], iteration_bounds = array<i64: 1, 7>, scalar_prefetch = 1 : i64, scratch_operands = 2 : i64, tpu.core_type = #tpu.core_type<tc>, window_params = [{transform_indices = @transform_0, window_bounds = array<i64: 8, 32, 128>}, {transform_indices = @transform_1, window_bounds = array<i64: 8, 128, 32>}, {transform_indices = @transform_2, window_bounds = array<i64: 1, 8, 128>}, {transform_indices = @transform_3, window_bounds = array<i64: 8, 1>}, {pipeline_mode = #tpu.pipeline_mode<synchronous>, transform_indices = @transform_4, window_bounds = array<i64: 1, 128>}, {transform_indices = @transform_5, window_bounds = array<i64: 8, 32>}, {transform_indices = @transform_6, window_bounds = array<i64: 8, 32>}, {pipeline_mode = #tpu.pipeline_mode<synchronous>, transform_indices = @transform_7, window_bounds = array<i64: 32, 192>}, {pipeline_mode = #tpu.pipeline_mode<synchronous>, transform_indices = @transform_8, window_bounds = array<i64: 1, 32>}, {pipeline_mode = #tpu.pipeline_mode<synchronous>, transform_indices = @transform_9, window_bounds = array<i64: 1, 32>}, {pipeline_mode = #tpu.pipeline_mode<synchronous>, transform_indices = @transform_10, window_bounds = array<i64: 32, 128>}, {transform_indices = @transform_11, window_bounds = array<i64: 1, 8, 32>}, {transform_indices = @transform_12, window_bounds = array<i64: 1, 8, 128>}]} {
    %c0_i32 = arith.constant 0 : i32
    %0 = arith.cmpi eq, %arg1, %c0_i32 : i32
    %1 = arith.extui %0 : i1 to i32
    %c0_i32_0 = arith.constant 0 : i32
    %2 = arith.cmpi ne, %1, %c0_i32_0 : i32
    scf.if %2 {
      %c0 = arith.constant 0 : index
      %c0_3 = arith.constant 0 : index
      %11 = vector.load %arg8[%c0, %c0_3] : memref<8x32xf32, #tpu.memory_space<vmem>>, vector<8x32xf32>
      %c0_4 = arith.constant 0 : index
      %c0_5 = arith.constant 0 : index
      %12 = vector.load %arg16[%c0_4, %c0_5] : memref<8x32xf32, #tpu.memory_space<vmem>>, vector<8x32xf32>
      tpu.vector_store %arg16[%c0_4, %c0_5], %11 {strides = array<i32>} : memref<8x32xf32, #tpu.memory_space<vmem>>, vector<8x32xf32>,
      %c0_6 = arith.constant 0 : index
      %c0_7 = arith.constant 0 : index
      %13 = vector.load %arg9[%c0_6, %c0_7] : memref<8x32xf32, #tpu.memory_space<vmem>>, vector<8x32xf32>
      %c0_8 = arith.constant 0 : index
      %c0_9 = arith.constant 0 : index
      %14 = vector.load %arg17[%c0_8, %c0_9] : memref<8x32xf32, #tpu.memory_space<vmem>>, vector<8x32xf32>
      tpu.vector_store %arg17[%c0_8, %c0_9], %13 {strides = array<i32>} : memref<8x32xf32, #tpu.memory_space<vmem>>, vector<8x32xf32>,
    } else {
    }
    %3 = arith.index_cast %arg0 : i32 to index
    %4 = memref.load %arg2[%3] : memref<1xi32, #tpu.memory_space<smem>>
    %5 = arith.cmpi slt, %arg1, %4 : i32
    %6 = arith.extui %5 : i1 to i32
    %c0_i32_1 = arith.constant 0 : i32
    %7 = arith.cmpi ne, %6, %c0_i32_1 : i32
    scf.if %7 {
      %c0 = arith.constant 0 : index
      %c0_3 = arith.constant 0 : index
      %11 = vector.load %arg16[%c0, %c0_3] : memref<8x32xf32, #tpu.memory_space<vmem>>, vector<8x32xf32>
      %c0_4 = arith.constant 0 : index
      %c0_5 = arith.constant 0 : index
      %12 = vector.load %arg17[%c0_4, %c0_5] : memref<8x32xf32, #tpu.memory_space<vmem>>, vector<8x32xf32>
      %13 = arith.truncf %11 : vector<8x32xf32> to vector<8x32xbf16>
      %c0_6 = arith.constant 0 : index
      %c0_7 = arith.constant 0 : index
      %14 = vector.load %arg10[%c0_6, %c0_7] : memref<32x192xbf16, #tpu.memory_space<vmem>>, vector<32x192xbf16>
      %cst = arith.constant dense<0.000000e+00> : vector<8x192xf32>
      %15 = tpu.matmul %13, %14, %cst {dimension_numbers = #tpu.dot_dimension_numbers<[1], [0], [0], [1], [0, 0, 1, 1], [], []>} : vector<8x32xbf16>, vector<32x192xbf16>, vector<8x192xf32> -> vector<8x192xf32>
      %16 = vector.extract_strided_slice %15 {offsets = [0, 0], sizes = [8, 128], strides = [1, 1]} : vector<8x192xf32> to vector<8x128xf32>
      %17 = vector.extract_strided_slice %15 {offsets = [0, 128], sizes = [8, 32], strides = [1, 1]} : vector<8x192xf32> to vector<8x32xf32>
      %18 = vector.extract_strided_slice %15 {offsets = [0, 160], sizes = [8, 32], strides = [1, 1]} : vector<8x192xf32> to vector<8x32xf32>
      %c0_8 = arith.constant 0 : index
      %c0_9 = arith.constant 0 : index
      %c0_10 = arith.constant 0 : index
      %19 = vector.load %arg3[%c0_8, %c0_9, %c0_10] : memref<8x32x128xbf16, #tpu.memory_space<vmem>>, vector<8x32x128xbf16>
      %20 = arith.extf %19 : vector<8x32x128xbf16> to vector<8x32x128xf32>
      %21 = vector.shape_cast %17 : vector<8x32xf32> to vector<8x32x1xf32>
      %22 = vector.broadcast %21 : vector<8x32x1xf32> to vector<8x32x128xf32>
      %23 = arith.addf %20, %22 : vector<8x32x128xf32>
      %cst_11 = arith.constant 0.000000e+00 : f32
      %24 = vector.broadcast %cst_11 : f32 to vector<8x32x128xf32>
      %25 = arith.maximumf %23, %24 : vector<8x32x128xf32>
      %c0_12 = arith.constant 0 : index
      %c0_13 = arith.constant 0 : index
      %26 = vector.load %arg11[%c0_12, %c0_13] : memref<1x32xbf16, #tpu.memory_space<vmem>>, vector<1x32xbf16>
      %27 = vector.shape_cast %26 : vector<1x32xbf16> to vector<1x1x32xbf16>
      %28 = vector.broadcast %27 : vector<1x1x32xbf16> to vector<8x1x32xbf16>
      %29 = arith.truncf %25 : vector<8x32x128xf32> to vector<8x32x128xbf16>
      "tpu.trace_start"() <{level = 10 : i32, message = "bka,bap->bkp"}> : () -> ()
      %cst_14 = arith.constant dense<0.000000e+00> : vector<8x1x128xf32>
      %30 = tpu.matmul %28, %29, %cst_14 {dimension_numbers = #tpu.dot_dimension_numbers<[2], [1], [1], [2], [0, 0, 0, 1, 1, 2], [0], [0]>} : vector<8x1x32xbf16>, vector<8x32x128xbf16>, vector<8x1x128xf32> -> vector<8x1x128xf32>
      "tpu.trace_stop"() : () -> ()
      %31 = vector.shape_cast %30 : vector<8x1x128xf32> to vector<8x128xf32>
      %c0_15 = arith.constant 0 : index
      %c0_16 = arith.constant 0 : index
      %32 = vector.load %arg7[%c0_15, %c0_16] : memref<1x128xf32, #tpu.memory_space<vmem>>, vector<1x128xf32>
      %33 = vector.broadcast %32 : vector<1x128xf32> to vector<8x128xf32>
      %34 = arith.addf %31, %33 : vector<8x128xf32>
      %cst_17 = arith.constant dense<0xFF800000> : vector<8xf32>
      %35 = vector.multi_reduction <maximumf>, %34, %cst_17 [1] : vector<8x128xf32> to vector<8xf32>
      %36 = vector.shape_cast %35 : vector<8xf32> to vector<8x1xf32>
      %37 = vector.broadcast %36 : vector<8x1xf32> to vector<8x128xf32>
      %38 = arith.subf %34, %37 : vector<8x128xf32>
      %39 = math.exp %38 : vector<8x128xf32>
      %cst_18 = arith.constant dense<0.000000e+00> : vector<8xf32>
      %40 = vector.multi_reduction <add>, %39, %cst_18 [1] : vector<8x128xf32> to vector<8xf32>
      %41 = vector.shape_cast %40 : vector<8xf32> to vector<8x1xf32>
      %42 = tpu.reciprocal %41 {approx = true} : vector<8x1xf32> -> vector<8x1xf32>
      %43 = vector.broadcast %42 : vector<8x1xf32> to vector<8x128xf32>
      %44 = arith.mulf %39, %43 : vector<8x128xf32>
      %45 = vector.shape_cast %44 : vector<8x128xf32> to vector<8x1x128xf32>
      %46 = arith.truncf %45 : vector<8x1x128xf32> to vector<8x1x128xbf16>
      %c0_19 = arith.constant 0 : index
      %c0_20 = arith.constant 0 : index
      %c0_21 = arith.constant 0 : index
      %47 = vector.load %arg4[%c0_19, %c0_20, %c0_21] : memref<8x128x32xbf16, #tpu.memory_space<vmem>>, vector<8x128x32xbf16>
      "tpu.trace_start"() <{level = 10 : i32, message = "bqp,bpe->bqe"}> : () -> ()
      %cst_22 = arith.constant dense<0.000000e+00> : vector<8x1x32xf32>
      %48 = tpu.matmul %46, %47, %cst_22 {dimension_numbers = #tpu.dot_dimension_numbers<[2], [1], [1], [2], [0, 0, 0, 1, 1, 2], [0], [0]>} : vector<8x1x128xbf16>, vector<8x128x32xbf16>, vector<8x1x32xf32> -> vector<8x1x32xf32>
      "tpu.trace_stop"() : () -> ()
      %49 = vector.shape_cast %48 : vector<8x1x32xf32> to vector<8x32xf32>
      %c0_23 = arith.constant 0 : index
      %c0_24 = arith.constant 0 : index
      %50 = vector.load %arg12[%c0_23, %c0_24] : memref<1x32xf32, #tpu.memory_space<vmem>>, vector<1x32xf32>
      %51 = vector.broadcast %50 : vector<1x32xf32> to vector<8x32xf32>
      %52 = arith.addf %18, %51 : vector<8x32xf32>
      %53 = arith.negf %52 : vector<8x32xf32>
      %54 = math.exp %53 : vector<8x32xf32>
      %cst_25 = arith.constant 1.000000e+00 : f32
      %55 = vector.broadcast %cst_25 : f32 to vector<8x32xf32>
      %56 = arith.addf %55, %54 : vector<8x32xf32>
      %57 = arith.divf %55, %56 : vector<8x32xf32>
      %58 = arith.mulf %57, %49 : vector<8x32xf32>
      %c0_26 = arith.constant 0 : index
      %c0_27 = arith.constant 0 : index
      %c0_28 = arith.constant 0 : index
      %59 = vector.load %arg5[%c0_26, %c0_27, %c0_28] : memref<1x8x128xf32, #tpu.memory_space<vmem>>, vector<1x8x128xf32>
      %60 = vector.shape_cast %59 : vector<1x8x128xf32> to vector<8x128xf32>
      %61 = arith.addf %60, %16 : vector<8x128xf32>
      %62 = arith.truncf %58 : vector<8x32xf32> to vector<8x32xbf16>
      %c0_29 = arith.constant 0 : index
      %c0_30 = arith.constant 0 : index
      %63 = vector.load %arg13[%c0_29, %c0_30] : memref<32x128xbf16, #tpu.memory_space<vmem>>, vector<32x128xbf16>
      %cst_31 = arith.constant dense<0.000000e+00> : vector<8x128xf32>
      %64 = tpu.matmul %62, %63, %cst_31 {dimension_numbers = #tpu.dot_dimension_numbers<[1], [0], [0], [1], [0, 0, 1, 1], [], []>} : vector<8x32xbf16>, vector<32x128xbf16>, vector<8x128xf32> -> vector<8x128xf32>
      %65 = arith.addf %61, %64 : vector<8x128xf32>
      %66 = vector.extract_strided_slice %65 {offsets = [0, 0], sizes = [8, 32], strides = [1, 1]} : vector<8x128xf32> to vector<8x32xf32>
      %67 = arith.negf %66 : vector<8x32xf32>
      %68 = math.exp %67 : vector<8x32xf32>
      %cst_32 = arith.constant 1.000000e+00 : f32
      %69 = vector.broadcast %cst_32 : f32 to vector<8x32xf32>
      %70 = arith.addf %69, %68 : vector<8x32xf32>
      %71 = arith.divf %69, %70 : vector<8x32xf32>
      %72 = vector.extract_strided_slice %65 {offsets = [0, 32], sizes = [8, 32], strides = [1, 1]} : vector<8x128xf32> to vector<8x32xf32>
      %73 = arith.negf %72 : vector<8x32xf32>
      %74 = math.exp %73 : vector<8x32xf32>
      %cst_33 = arith.constant 1.000000e+00 : f32
      %75 = vector.broadcast %cst_33 : f32 to vector<8x32xf32>
      %76 = arith.addf %75, %74 : vector<8x32xf32>
      %77 = arith.divf %75, %76 : vector<8x32xf32>
      %78 = vector.extract_strided_slice %65 {offsets = [0, 64], sizes = [8, 32], strides = [1, 1]} : vector<8x128xf32> to vector<8x32xf32>
      %79 = math.tanh %78 : vector<8x32xf32>
      %80 = vector.extract_strided_slice %65 {offsets = [0, 96], sizes = [8, 32], strides = [1, 1]} : vector<8x128xf32> to vector<8x32xf32>
      %81 = arith.negf %80 : vector<8x32xf32>
      %82 = math.exp %81 : vector<8x32xf32>
      %cst_34 = arith.constant 1.000000e+00 : f32
      %83 = vector.broadcast %cst_34 : f32 to vector<8x32xf32>
      %84 = arith.addf %83, %82 : vector<8x32xf32>
      %85 = arith.divf %83, %84 : vector<8x32xf32>
      %86 = arith.mulf %77, %12 : vector<8x32xf32>
      %87 = arith.mulf %71, %79 : vector<8x32xf32>
      %88 = arith.addf %86, %87 : vector<8x32xf32>
      %89 = math.tanh %88 : vector<8x32xf32>
      %90 = arith.mulf %85, %89 : vector<8x32xf32>
      %c0_35 = arith.constant 0 : index
      %c0_36 = arith.constant 0 : index
      %91 = vector.load %arg6[%c0_35, %c0_36] : memref<8x1xi32, #tpu.memory_space<vmem>>, vector<8x1xi32>
      %92 = vector.broadcast %arg1 : i32 to vector<8x1xi32>
      %93 = arith.cmpi sgt, %91, %92 : vector<8x1xi32>
      %94 = vector.shape_cast %93 : vector<8x1xi1> to vector<8x1xi1>
      %95 = vector.broadcast %94 : vector<8x1xi1> to vector<8x32xi1>
      %96 = arith.select %95, %90, %11 : vector<8x32xi1>, vector<8x32xf32>
      %97 = vector.shape_cast %93 : vector<8x1xi1> to vector<8x1xi1>
      %98 = vector.broadcast %97 : vector<8x1xi1> to vector<8x32xi1>
      %99 = arith.select %98, %88, %12 : vector<8x32xi1>, vector<8x32xf32>
      %c0_37 = arith.constant 0 : index
      %c0_38 = arith.constant 0 : index
      %100 = vector.load %arg16[%c0_37, %c0_38] : memref<8x32xf32, #tpu.memory_space<vmem>>, vector<8x32xf32>
      tpu.vector_store %arg16[%c0_37, %c0_38], %96 {strides = array<i32>} : memref<8x32xf32, #tpu.memory_space<vmem>>, vector<8x32xf32>,
      %c0_39 = arith.constant 0 : index
      %c0_40 = arith.constant 0 : index
      %101 = vector.load %arg17[%c0_39, %c0_40] : memref<8x32xf32, #tpu.memory_space<vmem>>, vector<8x32xf32>
      tpu.vector_store %arg17[%c0_39, %c0_40], %99 {strides = array<i32>} : memref<8x32xf32, #tpu.memory_space<vmem>>, vector<8x32xf32>,
      %c0_41 = arith.constant 0 : index
      %c0_42 = arith.constant 0 : index
      %c0_43 = arith.constant 0 : index
      %102 = vector.load %arg14[%c0_41, %c0_42, %c0_43] : memref<1x8x32xf32, #tpu.memory_space<vmem>>, vector<1x8x32xf32>
      %103 = vector.shape_cast %102 : vector<1x8x32xf32> to vector<8x32xf32>
      %104 = vector.shape_cast %96 : vector<8x32xf32> to vector<1x8x32xf32>
      tpu.vector_store %arg14[%c0_41, %c0_42, %c0_43], %104 {strides = array<i32>} : memref<1x8x32xf32, #tpu.memory_space<vmem>>, vector<1x8x32xf32>,
      %cst_44 = arith.constant 0.000000e+00 : f32
      %105 = vector.shape_cast %93 : vector<8x1xi1> to vector<8x1xi1>
      %106 = vector.broadcast %105 : vector<8x1xi1> to vector<8x128xi1>
      %107 = vector.broadcast %cst_44 : f32 to vector<8x128xf32>
      %108 = arith.select %106, %44, %107 : vector<8x128xi1>, vector<8x128xf32>
      %c0_45 = arith.constant 0 : index
      %c0_46 = arith.constant 0 : index
      %c0_47 = arith.constant 0 : index
      %109 = vector.load %arg15[%c0_45, %c0_46, %c0_47] : memref<1x8x128xf32, #tpu.memory_space<vmem>>, vector<1x8x128xf32>
      %110 = vector.shape_cast %109 : vector<1x8x128xf32> to vector<8x128xf32>
      %111 = vector.shape_cast %108 : vector<8x128xf32> to vector<1x8x128xf32>
      tpu.vector_store %arg15[%c0_45, %c0_46, %c0_47], %111 {strides = array<i32>} : memref<1x8x128xf32, #tpu.memory_space<vmem>>, vector<1x8x128xf32>,
    } else {
    }
    %true = arith.constant true
    %8 = arith.xori %5, %true : i1
    %9 = arith.extui %8 : i1 to i32
    %c0_i32_2 = arith.constant 0 : i32
    %10 = arith.cmpi ne, %9, %c0_i32_2 : i32
    scf.if %10 {
      %c0 = arith.constant 0 : index
      %c0_3 = arith.constant 0 : index
      %11 = vector.load %arg16[%c0, %c0_3] : memref<8x32xf32, #tpu.memory_space<vmem>>, vector<8x32xf32>
      %c0_4 = arith.constant 0 : index
      %c0_5 = arith.constant 0 : index
      %c0_6 = arith.constant 0 : index
      %12 = vector.load %arg14[%c0_4, %c0_5, %c0_6] : memref<1x8x32xf32, #tpu.memory_space<vmem>>, vector<1x8x32xf32>
      %13 = vector.shape_cast %12 : vector<1x8x32xf32> to vector<8x32xf32>
      %14 = vector.shape_cast %11 : vector<8x32xf32> to vector<1x8x32xf32>
      tpu.vector_store %arg14[%c0_4, %c0_5, %c0_6], %14 {strides = array<i32>} : memref<1x8x32xf32, #tpu.memory_space<vmem>>, vector<1x8x32xf32>,
      %cst = arith.constant 0.000000e+00 : f32
      %15 = vector.broadcast %cst : f32 to vector<8x128xf32>
      %c0_7 = arith.constant 0 : index
      %c0_8 = arith.constant 0 : index
      %c0_9 = arith.constant 0 : index
      %16 = vector.load %arg15[%c0_7, %c0_8, %c0_9] : memref<1x8x128xf32, #tpu.memory_space<vmem>>, vector<1x8x128xf32>
      %17 = vector.shape_cast %16 : vector<1x8x128xf32> to vector<8x128xf32>
      %18 = vector.shape_cast %15 : vector<8x128xf32> to vector<1x8x128xf32>
      tpu.vector_store %arg15[%c0_7, %c0_8, %c0_9], %18 {strides = array<i32>} : memref<1x8x128xf32, #tpu.memory_space<vmem>>, vector<1x8x128xf32>,
    } else {
    }
    return
  }
  func.func @transform_0(%arg0: i32, %arg1: i32, %arg2: memref<1xi32, #tpu.memory_space<smem>>) -> (i32, i32, i32) {
    %c0_i32 = arith.constant 0 : i32
    %c0_i32_0 = arith.constant 0 : i32
    %c0_i32_1 = arith.constant 0 : i32
    return %arg0, %c0_i32, %c0_i32_0 : i32, i32, i32
  }
  func.func @transform_1(%arg0: i32, %arg1: i32, %arg2: memref<1xi32, #tpu.memory_space<smem>>) -> (i32, i32, i32) {
    %c0_i32 = arith.constant 0 : i32
    %c0_i32_0 = arith.constant 0 : i32
    %c0_i32_1 = arith.constant 0 : i32
    return %arg0, %c0_i32, %c0_i32_0 : i32, i32, i32
  }
  func.func @transform_2(%arg0: i32, %arg1: i32, %arg2: memref<1xi32, #tpu.memory_space<smem>>) -> (i32, i32, i32) {
    %c0_i32 = arith.constant 0 : i32
    %c0_i32_0 = arith.constant 0 : i32
    return %arg1, %arg0, %c0_i32 : i32, i32, i32
  }
  func.func @transform_3(%arg0: i32, %arg1: i32, %arg2: memref<1xi32, #tpu.memory_space<smem>>) -> (i32, i32) {
    %c0_i32 = arith.constant 0 : i32
    %c0_i32_0 = arith.constant 0 : i32
    return %arg0, %c0_i32 : i32, i32
  }
  func.func @transform_4(%arg0: i32, %arg1: i32, %arg2: memref<1xi32, #tpu.memory_space<smem>>) -> (i32, i32) {
    %c0_i32 = arith.constant 0 : i32
    %c0_i32_0 = arith.constant 0 : i32
    %c0_i32_1 = arith.constant 0 : i32
    return %c0_i32, %c0_i32_0 : i32, i32
  }
  func.func @transform_5(%arg0: i32, %arg1: i32, %arg2: memref<1xi32, #tpu.memory_space<smem>>) -> (i32, i32) {
    %c0_i32 = arith.constant 0 : i32
    %c0_i32_0 = arith.constant 0 : i32
    return %arg0, %c0_i32 : i32, i32
  }
  func.func @transform_6(%arg0: i32, %arg1: i32, %arg2: memref<1xi32, #tpu.memory_space<smem>>) -> (i32, i32) {
    %c0_i32 = arith.constant 0 : i32
    %c0_i32_0 = arith.constant 0 : i32
    return %arg0, %c0_i32 : i32, i32
  }
  func.func @transform_7(%arg0: i32, %arg1: i32, %arg2: memref<1xi32, #tpu.memory_space<smem>>) -> (i32, i32) {
    %c0_i32 = arith.constant 0 : i32
    %c0_i32_0 = arith.constant 0 : i32
    %c0_i32_1 = arith.constant 0 : i32
    return %c0_i32, %c0_i32_0 : i32, i32
  }
  func.func @transform_8(%arg0: i32, %arg1: i32, %arg2: memref<1xi32, #tpu.memory_space<smem>>) -> (i32, i32) {
    %c0_i32 = arith.constant 0 : i32
    %c0_i32_0 = arith.constant 0 : i32
    %c0_i32_1 = arith.constant 0 : i32
    return %c0_i32, %c0_i32_0 : i32, i32
  }
  func.func @transform_9(%arg0: i32, %arg1: i32, %arg2: memref<1xi32, #tpu.memory_space<smem>>) -> (i32, i32) {
    %c0_i32 = arith.constant 0 : i32
    %c0_i32_0 = arith.constant 0 : i32
    %c0_i32_1 = arith.constant 0 : i32
    return %c0_i32, %c0_i32_0 : i32, i32
  }
  func.func @transform_10(%arg0: i32, %arg1: i32, %arg2: memref<1xi32, #tpu.memory_space<smem>>) -> (i32, i32) {
    %c0_i32 = arith.constant 0 : i32
    %c0_i32_0 = arith.constant 0 : i32
    %c0_i32_1 = arith.constant 0 : i32
    return %c0_i32, %c0_i32_0 : i32, i32
  }
  func.func @transform_11(%arg0: i32, %arg1: i32, %arg2: memref<1xi32, #tpu.memory_space<smem>>) -> (i32, i32, i32) {
    %c0_i32 = arith.constant 0 : i32
    %c0_i32_0 = arith.constant 0 : i32
    return %arg1, %arg0, %c0_i32 : i32, i32, i32
  }
  func.func @transform_12(%arg0: i32, %arg1: i32, %arg2: memref<1xi32, #tpu.memory_space<smem>>) -> (i32, i32, i32) {
    %c0_i32 = arith.constant 0 : i32
    %c0_i32_0 = arith.constant 0 : i32
    return %arg1, %arg0, %c0_i32 : i32, i32, i32
  }
}

</mosaic_0001>

<llo_original>
// kernel: tpu_custom_call.1
$region0: #{tpu_custom_call.1}
  #allocation0 [shape = 'u32[]', space=smem, size = 0x4, offset = 0x4, fixed_abs, tag = 'smem constant byte address 0x4 - core index']
  #allocation1 [shape = 'u32[144,128]{1,0:T(1,128)}', space=vmem, size = 0x12000, scoped, tag = 'internal scratch']
  #allocation2 [shape = 'f32[8,32]{1,0:T(8,128)}', space=vmem, size = 0x1000, scoped, tag = 'scratch operand']
  #allocation3 [shape = 'f32[8,32]{1,0:T(8,128)}', space=vmem, size = 0x1000, scoped, tag = 'scratch operand']
  #allocation4 [shape = 's32[1]{0}', space=sflag, size = 0x4, scoped, tag = 'scoped memory for tpu_custom_call.1']
  #allocation5 [shape = 's32[1]{0:T(128)S(6)}', space=smem, size = 0x200, scoped, tag = 'prefetched SMEM operand 0']
  %s0 = inlined_call_operand.<no memory space> [shape: s32[1], index: 0, kind: input, shape index: {}]
  %s1 = inlined_call_operand.vmem [shape: bf16[8,32,128], index: 1, kind: input, shape index: {}]
  %s2 = inlined_call_operand.vmem [shape: bf16[8,128,32], index: 2, kind: input, shape index: {}]
  %s3 = inlined_call_operand.vmem [shape: f32[7,8,128], index: 3, kind: input, shape index: {}]
  %s4 = inlined_call_operand.vmem [shape: s32[8,1], index: 4, kind: input, shape index: {}]
  %s5 = inlined_call_operand.vmem [shape: f32[1,128], index: 5, kind: input, shape index: {}]
  %s6 = inlined_call_operand.vmem [shape: f32[8,32], index: 6, kind: input, shape index: {}]
  %s7 = inlined_call_operand.vmem [shape: f32[8,32], index: 7, kind: input, shape index: {}]
  %s8 = inlined_call_operand.vmem [shape: bf16[32,192], index: 8, kind: input, shape index: {}]
  %s9 = inlined_call_operand.vmem [shape: bf16[1,32], index: 9, kind: input, shape index: {}]
  %s10 = inlined_call_operand.vmem [shape: f32[1,32], index: 10, kind: input, shape index: {}]
  %s11 = inlined_call_operand.vmem [shape: bf16[32,128], index: 11, kind: input, shape index: {}]
  %s12 = inlined_call_operand.hbm [shape: f32[7,8,32], index: 12, kind: output, shape index: {0}]
  %s13 = inlined_call_operand.hbm [shape: f32[7,8,128], index: 13, kind: output, shape index: {1}]
  %14 = xla_tuple %s12, %s13
  %s15 = sld [smem:[#allocation0]]
  $region97: #{tpu_custom_call.1} parent=0
    _
  %s17 = ssub.s32 1, %s15
  %s18 = scalar_select 0, %s17, %s15
  %19 = sst [smem:[#allocation5]] %s0
  $region1: #{tpu_custom_call.1} parent=0
    #allocation6 [shape = 'u8[8192]{0}', space=vmem, size = 0x2000, scoped, tag = 'output window, operand 0']
    #allocation7 [shape = 's32[2]{0}', space=sflag, size = 0x8, scoped, tag = 'scoped memory for tpu_custom_call.1']
    #allocation8 [shape = 'u8[8192]{0}', space=vmem, size = 0x2000, scoped, tag = 'output window, operand 1']
    #allocation9 [shape = 's32[2]{0}', space=sflag, size = 0x8, scoped, tag = 'scoped memory for tpu_custom_call.1']
    %20 = vsyncpa [#allocation7], 0
    %s21 = scalar_lea.sflag [#allocation7], 1
    %22 = vsyncpa %s21, 0
    %23 = vsyncpa [#allocation9], 0
    %s24 = scalar_lea.sflag [#allocation9], 1
    %25 = vsyncpa %s24, 0
    loop: start=0, step=1, limit=9
    $region2: #{tpu_custom_call.1} parent=1 // loop_pre_header
      _
    $region3: #{tpu_custom_call.1} parent=1 // loop_header
      %s27 = sphi 0, %s31
      %p28 = scmp.ge.s32.totalorder %s27, 9
      %s34 = sphi 0, %s46
      %s35 = sphi 0, %s42
      %s36 = sphi 0, %s34
      %s37 = sphi 0, %s35
      %s38 = sphi 0, %s36
      %s39 = sphi 0, %s37
      %s49 = sphi 0, %s51
      %s52 = sphi 0, %s49
      %s53 = sphi 0, %s52
      %s69 = sphi 0, %s53
      %s75 = sphi 0, %s77
      %s78 = sphi 0, %s75
      %s79 = sphi 0, %s78
      %s95 = sphi 0, %s79
      %s103 = sphi 0, %s105
      %s106 = sphi 0, %s103
      %s107 = sphi 0, %s106
      %s123 = sphi 0, %s107
      %s129 = sphi 0, %s131
      %s132 = sphi 0, %s129
      %s133 = sphi 0, %s132
      %s149 = sphi 0, %s133
      %s153 = sphi 0, %s153
      %s155 = sphi 0, %s153
      %s156 = sphi 0, %s155
      %s170 = sphi 0, %s156
      %s176 = sphi 0, %s178
      %s179 = sphi 0, %s176
      %s180 = sphi 0, %s179
      %s196 = sphi 0, %s180
      %s202 = sphi 0, %s204
      %s205 = sphi 0, %s202
      %s206 = sphi 0, %s205
      %s222 = sphi 0, %s206
      %s226 = sphi 0, %s226
      %s228 = sphi 0, %s226
      %s229 = sphi 0, %s228
      %s243 = sphi 0, %s229
      %s247 = sphi 0, %s247
      %s249 = sphi 0, %s247
      %s250 = sphi 0, %s249
      %s264 = sphi 0, %s250
      %s268 = sphi 0, %s268
      %s270 = sphi 0, %s268
      %s271 = sphi 0, %s270
      %s285 = sphi 0, %s271
      %s289 = sphi 0, %s289
      %s291 = sphi 0, %s289
      %s292 = sphi 0, %s291
      %s306 = sphi 0, %s292
      %s314 = sphi 0, %s316
      %s317 = sphi 0, %s314
      %s318 = sphi 0, %s317
      %s334 = sphi 0, %s318
      %s342 = sphi 0, %s344
      %s345 = sphi 0, %s342
      %s346 = sphi 0, %s345
      %s362 = sphi 0, %s346
    $region4: #{tpu_custom_call.1} parent=1 // loop_header_branch
      %30 = sbr.rel (%p28) target = $region8
    $region5: #{tpu_custom_call.1} parent=1 // loop_body
      %s32 = ssub.s32 %s27, 1
      %s33 = ssub.s32 %s27, 2
      %s40 = sadd.s32 1, %s35
      %p41 = scmp.ge.s32.totalorder %s40, 7
      %s42 = scalar_select %p41, 0, %s40
      %s43 = sadd.s32 1, %s34
      %s44 = scalar_select %p41, %s43, %s34
      %p45 = scmp.ge.s32.totalorder %s44, 1
      %s46 = scalar_select %p45, 0, %s44
      %s47 = ssub.s32 %s34, %s46
      %p48 = scmp.eq.s32.totalorder %s47, 0
      %s50 = sadd.s32 %s49, 1
      %s51 = scalar_select %p48, %s49, %s50
      %p54 = pneg %p48
      %p55 = scmp.eq.s32.totalorder %s27, 6
      %p56 = por %p54, %p55
      %p57 = scmp.ne.s32.totalorder %s49, %s52
      %p58 = scmp.eq.s32.totalorder %s27, 0
      %p59 = por %p57, %p58
      %p60 = scmp.ne.s32.totalorder %s49, %s52
      %p61 = scmp.eq.s32.totalorder %s32, 6
      %p62 = por %p60, %p61
      %p63 = scmp.ne.s32.totalorder %s52, %s53
      %p64 = scmp.eq.s32.totalorder %s32, 0
      %p65 = por %p63, %p64
      %p66 = scmp.ne.s32.totalorder %s52, %s53
      %p67 = scmp.eq.s32.totalorder %s33, 6
      %p68 = por %p66, %p67
      %p70 = scmp.ne.s32.totalorder %s53, %s69
      %p71 = scmp.eq.s32.totalorder %s33, 0
      %p72 = por %p70, %p71
      %s73 = ssub.s32 %s34, %s46
      %p74 = scmp.eq.s32.totalorder %s73, 0
      %s76 = sadd.s32 %s75, 1
      %s77 = scalar_select %p74, %s75, %s76
      %p80 = pneg %p74
      %p81 = scmp.eq.s32.totalorder %s27, 6
      %p82 = por %p80, %p81
      %p83 = scmp.ne.s32.totalorder %s75, %s78
      %p84 = scmp.eq.s32.totalorder %s27, 0
      %p85 = por %p83, %p84
      %p86 = scmp.ne.s32.totalorder %s75, %s78
      %p87 = scmp.eq.s32.totalorder %s32, 6
      %p88 = por %p86, %p87
      %p89 = scmp.ne.s32.totalorder %s78, %s79
      %p90 = scmp.eq.s32.totalorder %s32, 0
      %p91 = por %p89, %p90
      %p92 = scmp.ne.s32.totalorder %s78, %s79
      %p93 = scmp.eq.s32.totalorder %s33, 6
      %p94 = por %p92, %p93
      %p96 = scmp.ne.s32.totalorder %s79, %s95
      %p97 = scmp.eq.s32.totalorder %s33, 0
      %p98 = por %p96, %p97
      %s99 = ssub.s32 %s35, %s42
      %s100 = ssub.s32 %s34, %s46
      %s101 = sor.u32 %s99, %s100
      %p102 = scmp.eq.s32.totalorder %s101, 0
      %s104 = sadd.s32 %s103, 1
      %s105 = scalar_select %p102, %s103, %s104
      %p108 = pneg %p102
      %p109 = scmp.eq.s32.totalorder %s27, 6
      %p110 = por %p108, %p109
      %p111 = scmp.ne.s32.totalorder %s103, %s106
      %p112 = scmp.eq.s32.totalorder %s27, 0
      %p113 = por %p111, %p112
      %p114 = scmp.ne.s32.totalorder %s103, %s106
      %p115 = scmp.eq.s32.totalorder %s32, 6
      %p116 = por %p114, %p115
      %p117 = scmp.ne.s32.totalorder %s106, %s107
      %p118 = scmp.eq.s32.totalorder %s32, 0
      %p119 = por %p117, %p118
      %p120 = scmp.ne.s32.totalorder %s106, %s107
      %p121 = scmp.eq.s32.totalorder %s33, 6
      %p122 = por %p120, %p121
      %p124 = scmp.ne.s32.totalorder %s107, %s123
      %p125 = scmp.eq.s32.totalorder %s33, 0
      %p126 = por %p124, %p125
      %s127 = ssub.s32 %s34, %s46
      %p128 = scmp.eq.s32.totalorder %s127, 0
      %s130 = sadd.s32 %s129, 1
      %s131 = scalar_select %p128, %s129, %s130
      %p134 = pneg %p128
      %p135 = scmp.eq.s32.totalorder %s27, 6
      %p136 = por %p134, %p135
      %p137 = scmp.ne.s32.totalorder %s129, %s132
      %p138 = scmp.eq.s32.totalorder %s27, 0
      %p139 = por %p137, %p138
      %p140 = scmp.ne.s32.totalorder %s129, %s132
      %p141 = scmp.eq.s32.totalorder %s32, 6
      %p142 = por %p140, %p141
      %p143 = scmp.ne.s32.totalorder %s132, %s133
      %p144 = scmp.eq.s32.totalorder %s32, 0
      %p145 = por %p143, %p144
      %p146 = scmp.ne.s32.totalorder %s132, %s133
      %p147 = scmp.eq.s32.totalorder %s33, 6
      %p148 = por %p146, %p147
      %p150 = scmp.ne.s32.totalorder %s133, %s149
      %p151 = scmp.eq.s32.totalorder %s33, 0
      %p152 = por %p150, %p151
      %s154 = sadd.s32 %s153, 1
      %p157 = scmp.eq.s32.totalorder %s27, 6
      %p158 = scmp.ne.s32.totalorder %s153, %s155
      %p159 = scmp.eq.s32.totalorder %s27, 0
      %p160 = por %p158, %p159
      %p161 = scmp.ne.s32.totalorder %s153, %s155
      %p162 = scmp.eq.s32.totalorder %s32, 6
      %p163 = por %p161, %p162
      %p164 = scmp.ne.s32.totalorder %s155, %s156
      %p165 = scmp.eq.s32.totalorder %s32, 0
      %p166 = por %p164, %p165
      %p167 = scmp.ne.s32.totalorder %s155, %s156
      %p168 = scmp.eq.s32.totalorder %s33, 6
      %p169 = por %p167, %p168
      %p171 = scmp.ne.s32.totalorder %s156, %s170
      %p172 = scmp.eq.s32.totalorder %s33, 0
      %p173 = por %p171, %p172
      %s174 = ssub.s32 %s34, %s46
      %p175 = scmp.eq.s32.totalorder %s174, 0
      %s177 = sadd.s32 %s176, 1
      %s178 = scalar_select %p175, %s176, %s177
      %p181 = pneg %p175
      %p182 = scmp.eq.s32.totalorder %s27, 6
      %p183 = por %p181, %p182
      %p184 = scmp.ne.s32.totalorder %s176, %s179
      %p185 = scmp.eq.s32.totalorder %s27, 0
      %p186 = por %p184, %p185
      %p187 = scmp.ne.s32.totalorder %s176, %s179
      %p188 = scmp.eq.s32.totalorder %s32, 6
      %p189 = por %p187, %p188
      %p190 = scmp.ne.s32.totalorder %s179, %s180
      %p191 = scmp.eq.s32.totalorder %s32, 0
      %p192 = por %p190, %p191
      %p193 = scmp.ne.s32.totalorder %s179, %s180
      %p194 = scmp.eq.s32.totalorder %s33, 6
      %p195 = por %p193, %p194
      %p197 = scmp.ne.s32.totalorder %s180, %s196
      %p198 = scmp.eq.s32.totalorder %s33, 0
      %p199 = por %p197, %p198
      %s200 = ssub.s32 %s34, %s46
      %p201 = scmp.eq.s32.totalorder %s200, 0
      %s203 = sadd.s32 %s202, 1
      %s204 = scalar_select %p201, %s202, %s203
      %p207 = pneg %p201
      %p208 = scmp.eq.s32.totalorder %s27, 6
      %p209 = por %p207, %p208
      %p210 = scmp.ne.s32.totalorder %s202, %s205
      %p211 = scmp.eq.s32.totalorder %s27, 0
      %p212 = por %p210, %p211
      %p213 = scmp.ne.s32.totalorder %s202, %s205
      %p214 = scmp.eq.s32.totalorder %s32, 6
      %p215 = por %p213, %p214
      %p216 = scmp.ne.s32.totalorder %s205, %s206
      %p217 = scmp.eq.s32.totalorder %s32, 0
      %p218 = por %p216, %p217
      %p219 = scmp.ne.s32.totalorder %s205, %s206
      %p220 = scmp.eq.s32.totalorder %s33, 6
      %p221 = por %p219, %p220
      %p223 = scmp.ne.s32.totalorder %s206, %s222
      %p224 = scmp.eq.s32.totalorder %s33, 0
      %p225 = por %p223, %p224
      %s227 = sadd.s32 %s226, 1
      %p230 = scmp.eq.s32.totalorder %s27, 6
      %p231 = scmp.ne.s32.totalorder %s226, %s228
      %p232 = scmp.eq.s32.totalorder %s27, 0
      %p233 = por %p231, %p232
      %p234 = scmp.ne.s32.totalorder %s226, %s228
      %p235 = scmp.eq.s32.totalorder %s32, 6
      %p236 = por %p234, %p235
      %p237 = scmp.ne.s32.totalorder %s228, %s229
      %p238 = scmp.eq.s32.totalorder %s32, 0
      %p239 = por %p237, %p238
      %p240 = scmp.ne.s32.totalorder %s228, %s229
      %p241 = scmp.eq.s32.totalorder %s33, 6
      %p242 = por %p240, %p241
      %p244 = scmp.ne.s32.totalorder %s229, %s243
      %p245 = scmp.eq.s32.totalorder %s33, 0
      %p246 = por %p244, %p245
      %s248 = sadd.s32 %s247, 1
      %p251 = scmp.eq.s32.totalorder %s27, 6
      %p252 = scmp.ne.s32.totalorder %s247, %s249
      %p253 = scmp.eq.s32.totalorder %s27, 0
      %p254 = por %p252, %p253
      %p255 = scmp.ne.s32.totalorder %s247, %s249
      %p256 = scmp.eq.s32.totalorder %s32, 6
      %p257 = por %p255, %p256
      %p258 = scmp.ne.s32.totalorder %s249, %s250
      %p259 = scmp.eq.s32.totalorder %s32, 0
      %p260 = por %p258, %p259
      %p261 = scmp.ne.s32.totalorder %s249, %s250
      %p262 = scmp.eq.s32.totalorder %s33, 6
      %p263 = por %p261, %p262
      %p265 = scmp.ne.s32.totalorder %s250, %s264
      %p266 = scmp.eq.s32.totalorder %s33, 0
      %p267 = por %p265, %p266
      %s269 = sadd.s32 %s268, 1
      %p272 = scmp.eq.s32.totalorder %s27, 6
      %p273 = scmp.ne.s32.totalorder %s268, %s270
      %p274 = scmp.eq.s32.totalorder %s27, 0
      %p275 = por %p273, %p274
      %p276 = scmp.ne.s32.totalorder %s268, %s270
      %p277 = scmp.eq.s32.totalorder %s32, 6
      %p278 = por %p276, %p277
      %p279 = scmp.ne.s32.totalorder %s270, %s271
      %p280 = scmp.eq.s32.totalorder %s32, 0
      %p281 = por %p279, %p280
      %p282 = scmp.ne.s32.totalorder %s270, %s271
      %p283 = scmp.eq.s32.totalorder %s33, 6
      %p284 = por %p282, %p283
      %p286 = scmp.ne.s32.totalorder %s271, %s285
      %p287 = scmp.eq.s32.totalorder %s33, 0
      %p288 = por %p286, %p287
      %s290 = sadd.s32 %s289, 1
      %p293 = scmp.eq.s32.totalorder %s27, 6
      %p294 = scmp.ne.s32.totalorder %s289, %s291
      %p295 = scmp.eq.s32.totalorder %s27, 0
      %p296 = por %p294, %p295
      %p297 = scmp.ne.s32.totalorder %s289, %s291
      %p298 = scmp.eq.s32.totalorder %s32, 6
      %p299 = por %p297, %p298
      %p300 = scmp.ne.s32.totalorder %s291, %s292
      %p301 = scmp.eq.s32.totalorder %s32, 0
      %p302 = por %p300, %p301
      %p303 = scmp.ne.s32.totalorder %s291, %s292
      %p304 = scmp.eq.s32.totalorder %s33, 6
      %p305 = por %p303, %p304
      %p307 = scmp.ne.s32.totalorder %s292, %s306
      %p308 = scmp.eq.s32.totalorder %s33, 0
      %p309 = por %p307, %p308
      %s310 = ssub.s32 %s35, %s42
      %s311 = ssub.s32 %s34, %s46
      %s312 = sor.u32 %s310, %s311
      %p313 = scmp.eq.s32.totalorder %s312, 0
      %s315 = sadd.s32 %s314, 1
      %s316 = scalar_select %p313, %s314, %s315
      %p319 = pneg %p313
      %p320 = scmp.eq.s32.totalorder %s27, 6
      %p321 = por %p319, %p320
      %p322 = scmp.ne.s32.totalorder %s314, %s317
      %p323 = scmp.eq.s32.totalorder %s27, 0
      %p324 = por %p322, %p323
      %p325 = scmp.ne.s32.totalorder %s314, %s317
      %p326 = scmp.eq.s32.totalorder %s32, 6
      %p327 = por %p325, %p326
      %p328 = scmp.ne.s32.totalorder %s317, %s318
      %p329 = scmp.eq.s32.totalorder %s32, 0
      %p330 = por %p328, %p329
      %p331 = scmp.ne.s32.totalorder %s317, %s318
      %p332 = scmp.eq.s32.totalorder %s33, 6
      %p333 = por %p331, %p332
      %p335 = scmp.ne.s32.totalorder %s318, %s334
      %p336 = scmp.eq.s32.totalorder %s33, 0
      %p337 = por %p335, %p336
      %s338 = ssub.s32 %s35, %s42
      %s339 = ssub.s32 %s34, %s46
      %s340 = sor.u32 %s338, %s339
      %p341 = scmp.eq.s32.totalorder %s340, 0
      %s343 = sadd.s32 %s342, 1
      %s344 = scalar_select %p341, %s342, %s343
      %p347 = pneg %p341
      %p348 = scmp.eq.s32.totalorder %s27, 6
      %p349 = por %p347, %p348
      %p350 = scmp.ne.s32.totalorder %s342, %s345
      %p351 = scmp.eq.s32.totalorder %s27, 0
      %p352 = por %p350, %p351
      %p353 = scmp.ne.s32.totalorder %s342, %s345
      %p354 = scmp.eq.s32.totalorder %s32, 6
      %p355 = por %p353, %p354
      %p356 = scmp.ne.s32.totalorder %s345, %s346
      %p357 = scmp.eq.s32.totalorder %s32, 0
      %p358 = por %p356, %p357
      %p359 = scmp.ne.s32.totalorder %s345, %s346
      %p360 = scmp.eq.s32.totalorder %s33, 6
      %p361 = por %p359, %p360
      %p363 = scmp.ne.s32.totalorder %s346, %s362
      %p364 = scmp.eq.s32.totalorder %s33, 0
      %p365 = por %p363, %p364
      %p366 = scmp.le.s32.totalorder 1, %s27
      %p367 = scmp.lt.s32.totalorder %s27, 8
      %p368 = pnand %p366, %p367
      %p369 = pneg %p368
      // Predicated region
      $region9: #{tpu_custom_call.1} parent=5 // pred_check
        _
      $region10: #{tpu_custom_call.1} parent=5 // pred_check_branch
        %371 = sbr.rel (%p368) target = $region12
      $region11: #{tpu_custom_call.1} parent=5 // pred_region
        %s372 = ssub.s32 %s27, 1
        // Predicated region
        $region13: #{tpu_custom_call.1} parent=11 // pred_check
          %p373 = pneg %p65
        $region14: #{tpu_custom_call.1} parent=11 // pred_check_branch
          %375 = sbr.rel (%p373) target = $region16
        $region15: #{tpu_custom_call.1} parent=11 // pred_region
          %s376 = smul.u32 8, %s36
          %p377 = scmp.lt.s32.totalorder %s376, 7
          %s378 = scalar_select %p377, %s376, 7
          %s379 = smul.addr %s378, 4
          %s380 = smul.addr %s379, 4
          %s381 = scalar_lea.vmem %s1, %s380
          %s382 = smul.u32 8, %s36
        $region16: #{tpu_custom_call.1} parent=11 // pred_fallthru
          _
        // Predicated region
        $region17: #{tpu_custom_call.1} parent=11 // pred_check
          %p383 = pneg %p91
        $region18: #{tpu_custom_call.1} parent=11 // pred_check_branch
          %385 = sbr.rel (%p383) target = $region20
        $region19: #{tpu_custom_call.1} parent=11 // pred_region
          %s386 = smul.u32 8, %s36
          %p387 = scmp.lt.s32.totalorder %s386, 7
          %s388 = scalar_select %p387, %s386, 7
          %s389 = smul.addr %s388, 16
          %s390 = smul.addr %s389, 4
          %s391 = scalar_lea.vmem %s2, %s390
          %s392 = smul.u32 8, %s36
        $region20: #{tpu_custom_call.1} parent=11 // pred_fallthru
          _
        // Predicated region
        $region21: #{tpu_custom_call.1} parent=11 // pred_check
          %p393 = pneg %p145
        $region22: #{tpu_custom_call.1} parent=11 // pred_check_branch
          %395 = sbr.rel (%p393) target = $region24
        $region23: #{tpu_custom_call.1} parent=11 // pred_region
          %p396 = scmp.lt.s32.totalorder %s36, 0
          %s397 = scalar_select %p396, %s36, 0
          %s398 = smul.addr %s397, 8
          %s399 = scalar_lea.vmem %s4, %s398
        $region24: #{tpu_custom_call.1} parent=11 // pred_fallthru
          _
        // Predicated region
        $region25: #{tpu_custom_call.1} parent=11 // pred_check
          %p400 = pneg %p166
        $region26: #{tpu_custom_call.1} parent=11 // pred_check_branch
          %402 = sbr.rel (%p400) target = $region28
        $region27: #{tpu_custom_call.1} parent=11 // pred_region
          _
        $region28: #{tpu_custom_call.1} parent=11 // pred_fallthru
          _
        // Predicated region
        $region29: #{tpu_custom_call.1} parent=11 // pred_check
          %p403 = pneg %p192
        $region30: #{tpu_custom_call.1} parent=11 // pred_check_branch
          %405 = sbr.rel (%p403) target = $region32
        $region31: #{tpu_custom_call.1} parent=11 // pred_region
          %p406 = scmp.lt.s32.totalorder %s36, 0
          %s407 = scalar_select %p406, %s36, 0
          %s408 = smul.addr %s407, 8
          %s409 = scalar_lea.vmem %s6, %s408
        $region32: #{tpu_custom_call.1} parent=11 // pred_fallthru
          _
        // Predicated region
        $region33: #{tpu_custom_call.1} parent=11 // pred_check
          %p410 = pneg %p218
        $region34: #{tpu_custom_call.1} parent=11 // pred_check_branch
          %412 = sbr.rel (%p410) target = $region36
        $region35: #{tpu_custom_call.1} parent=11 // pred_region
          %p413 = scmp.lt.s32.totalorder %s36, 0
          %s414 = scalar_select %p413, %s36, 0
          %s415 = smul.addr %s414, 8
          %s416 = scalar_lea.vmem %s7, %s415
        $region36: #{tpu_custom_call.1} parent=11 // pred_fallthru
          _
        // Predicated region
        $region37: #{tpu_custom_call.1} parent=11 // pred_check
          %p417 = pneg %p239
        $region38: #{tpu_custom_call.1} parent=11 // pred_check_branch
          %419 = sbr.rel (%p417) target = $region40
        $region39: #{tpu_custom_call.1} parent=11 // pred_region
          _
        $region40: #{tpu_custom_call.1} parent=11 // pred_fallthru
          _
        // Predicated region
        $region41: #{tpu_custom_call.1} parent=11 // pred_check
          %p420 = pneg %p260
        $region42: #{tpu_custom_call.1} parent=11 // pred_check_branch
          %422 = sbr.rel (%p420) target = $region44
        $region43: #{tpu_custom_call.1} parent=11 // pred_region
          _
        $region44: #{tpu_custom_call.1} parent=11 // pred_fallthru
          _
        // Predicated region
        $region45: #{tpu_custom_call.1} parent=11 // pred_check
          %p423 = pneg %p281
        $region46: #{tpu_custom_call.1} parent=11 // pred_check_branch
          %425 = sbr.rel (%p423) target = $region48
        $region47: #{tpu_custom_call.1} parent=11 // pred_region
          _
        $region48: #{tpu_custom_call.1} parent=11 // pred_fallthru
          _
        // Predicated region
        $region49: #{tpu_custom_call.1} parent=11 // pred_check
          %p426 = pneg %p302
        $region50: #{tpu_custom_call.1} parent=11 // pred_check_branch
          %428 = sbr.rel (%p426) target = $region52
        $region51: #{tpu_custom_call.1} parent=11 // pred_region
          _
        $region52: #{tpu_custom_call.1} parent=11 // pred_fallthru
          _
      $region12: #{tpu_custom_call.1} parent=5 // pred_fallthru
        _
      %p429 = scmp.lt.s32.totalorder %s27, 7
      // Predicated region
      $region53: #{tpu_custom_call.1} parent=5 // pred_check
        %p430 = pneg %p429
      $region54: #{tpu_custom_call.1} parent=5 // pred_check_branch
        %432 = sbr.rel (%p430) target = $region56
      $region55: #{tpu_custom_call.1} parent=5 // pred_region
        // Predicated region
        $region57: #{tpu_custom_call.1} parent=55 // pred_check
          %p433 = pneg %p113
        $region58: #{tpu_custom_call.1} parent=55 // pred_check_branch
          %435 = sbr.rel (%p433) target = $region60
        $region59: #{tpu_custom_call.1} parent=55 // pred_region
          %p436 = scmp.lt.s32.totalorder %s35, 6
          %s437 = scalar_select %p436, %s35, 6
          %p438 = scmp.lt.s32.totalorder %s34, 0
          %s439 = scalar_select %p438, %s34, 0
          %s440 = sadd.s32 %s439, %s437
          %s441 = smul.addr %s440, 8
          %s442 = scalar_lea.vmem %s3, %s441
        $region60: #{tpu_custom_call.1} parent=55 // pred_fallthru
          _
      $region56: #{tpu_custom_call.1} parent=5 // pred_fallthru
        _
      %p443 = scmp.le.s32.totalorder 1, %s27
      %p444 = scmp.lt.s32.totalorder %s27, 8
      %p445 = pnand %p443, %p444
      %p446 = pneg %p445
      // Predicated region
      $region61: #{tpu_custom_call.1} parent=5 // pred_check
        _
      $region62: #{tpu_custom_call.1} parent=5 // pred_check_branch
        %448 = sbr.rel (%p445) target = $region64
      $region63: #{tpu_custom_call.1} parent=5 // pred_region
        %s449 = ssub.s32 %s27, 1
        %s450 = smul.u32 8, %s36
        %p451 = scmp.lt.s32.totalorder %s450, 7
        %s452 = scalar_select %p451, %s450, 7
        %s453 = smul.addr %s452, 4
        %s454 = smul.addr %s453, 4
        %s455 = scalar_lea.vmem %s1, %s454
        %p456 = pneg %p65
        %p457 = pneg %p62
        %s458 = smul.u32 8, %s36
        %p459 = scmp.lt.s32.totalorder %s458, 7
        %s460 = scalar_select %p459, %s458, 7
        %s461 = smul.addr %s460, 16
        %s462 = smul.addr %s461, 4
        %s463 = scalar_lea.vmem %s2, %s462
        %p464 = pneg %p91
        %p465 = pneg %p88
        %p466 = scmp.lt.s32.totalorder %s37, 6
        %s467 = scalar_select %p466, %s37, 6
        %p468 = scmp.lt.s32.totalorder %s36, 0
        %s469 = scalar_select %p468, %s36, 0
        %s470 = sadd.s32 %s469, %s467
        %s471 = smul.addr %s470, 8
        %s472 = scalar_lea.vmem %s3, %s471
        %p473 = pneg %p119
        %p474 = pneg %p116
        %p475 = scmp.lt.s32.totalorder %s36, 0
        %s476 = scalar_select %p475, %s36, 0
        %s477 = smul.addr %s476, 8
        %s478 = scalar_lea.vmem %s4, %s477
        %p479 = pneg %p145
        %p480 = pneg %p142
        %p481 = pneg %p166
        %p482 = pneg %p163
        %p483 = scmp.lt.s32.totalorder %s36, 0
        %s484 = scalar_select %p483, %s36, 0
        %s485 = smul.addr %s484, 8
        %s486 = scalar_lea.vmem %s6, %s485
        %p487 = pneg %p192
        %p488 = pneg %p189
        %p489 = scmp.lt.s32.totalorder %s36, 0
        %s490 = scalar_select %p489, %s36, 0
        %s491 = smul.addr %s490, 8
        %s492 = scalar_lea.vmem %s7, %s491
        %p493 = pneg %p218
        %p494 = pneg %p215
        %p495 = pneg %p239
        %p496 = pneg %p236
        %p497 = pneg %p260
        %p498 = pneg %p257
        %p499 = pneg %p281
        %p500 = pneg %p278
        %p501 = pneg %p302
        %p502 = pneg %p299
        %p503 = pneg %p330
        %p504 = pneg %p327
        %s505 = sand.u32 %s317, 1
        %s506 = scalar_lea.sflag [#allocation7], %s505
        %s507 = sand.u32 %s317, 1
        %s508 = smul.addr %s507, 8
        %s509 = scalar_lea.vmem [#allocation6], %s508
        %p510 = pneg %p358
        %p511 = pneg %p355
        %s512 = sand.u32 %s345, 1
        %s513 = scalar_lea.sflag [#allocation9], %s512
        %s514 = sand.u32 %s345, 1
        %s515 = smul.addr %s514, 8
        %s516 = scalar_lea.vmem [#allocation8], %s515
        %s517 = smul.u32 8, %s36
        %p518 = scmp.lt.s32.totalorder %s517, 7
        %s519 = scalar_select %p518, %s517, 7
        %s520 = smul.addr %s519, 4
        %s521 = smul.addr %s520, 4
        %s522 = scalar_lea.vmem %s1, %s521
        %s523 = smul.u32 8, %s36
        %s524 = smul.u32 8, %s36
        %p525 = scmp.lt.s32.totalorder %s524, 7
        %s526 = scalar_select %p525, %s524, 7
        %s527 = smul.addr %s526, 16
        %s528 = smul.addr %s527, 4
        %s529 = scalar_lea.vmem %s2, %s528
        %s530 = smul.u32 8, %s36
        %p531 = scmp.lt.s32.totalorder %s37, 6
        %s532 = scalar_select %p531, %s37, 6
        %p533 = scmp.lt.s32.totalorder %s36, 0
        %s534 = scalar_select %p533, %s36, 0
        %s535 = sadd.s32 %s534, %s532
        %s536 = smul.addr %s535, 8
        %s537 = scalar_lea.vmem %s3, %s536
        %p538 = scmp.lt.s32.totalorder %s36, 0
        %s539 = scalar_select %p538, %s36, 0
        %s540 = smul.addr %s539, 8
        %s541 = scalar_lea.vmem %s4, %s540
        %p542 = scmp.lt.s32.totalorder %s36, 0
        %s543 = scalar_select %p542, %s36, 0
        %s544 = smul.addr %s543, 8
        %s545 = scalar_lea.vmem %s6, %s544
        %p546 = scmp.lt.s32.totalorder %s36, 0
        %s547 = scalar_select %p546, %s36, 0
        %s548 = smul.addr %s547, 8
        %s549 = scalar_lea.vmem %s7, %s548
        %p551 = scmp.eq.s32.totalorder %s37, 0
        // Predicated region
        $region65: #{tpu_custom_call.1} parent=63 // pred_check
          %p552 = pneg %p551
        $region66: #{tpu_custom_call.1} parent=63 // pred_check_branch
          %554 = sbr.rel (%p552) target = $region68
        $region67: #{tpu_custom_call.1} parent=63 // pred_region
          %v555 = vld [vmem:[%s545] sm:$0xff]
          %vm556 = vcmask 261120
          %557 = vst.msk [vmem:[#allocation2] sm:$0xff] %vm556, %v555
          %v558 = vld [vmem:[%s549] sm:$0xff]
          %559 = vst.msk [vmem:[#allocation3] sm:$0xff] %vm556, %v558
        $region68: #{tpu_custom_call.1} parent=63 // pred_fallthru
          _
        %s560 = sld [smem:[#allocation5 + %s36]]
        %p561 = scmp.lt.s32.totalorder %s37, %s560
        // Predicated region
        $region69: #{tpu_custom_call.1} parent=63 // pred_check
          %p562 = pneg %p561
        $region70: #{tpu_custom_call.1} parent=63 // pred_check_branch
          %564 = sbr.rel (%p562) target = $region72
        $region71: #{tpu_custom_call.1} parent=63 // pred_region
          %v565 = vld [vmem:[#allocation2] sm:$0xff]
          %v566 = vld [vmem:[#allocation3] sm:$0xff]
          %v567 = vpack.c.bf16 %v565, %v565
          %v568 = vld [vmem:[%s8] sm:$0xff]
          %v569 = vld [vmem:[%s8 + $0x8] sm:$0xff]
          %v570 = vld [vmem:[%s8 + $0x10] sm:$0xff]
          %v571 = vld [vmem:[%s8 + $0x18] sm:$0xff]
          %v576 = vunpack.c.l.b16 %v568
          %v577 = vunpack.c.h.b16 %v568
          %v578 = vunpack.c.l.b16 %v569
          %v579 = vunpack.c.h.b16 %v569
          %v580 = vunpack.c.l.b16 %v570
          %v581 = vunpack.c.h.b16 %v570
          %v582 = vunpack.c.l.b16 %v571
          %v583 = vunpack.c.h.b16 %v571
          %v584 = vpack.c.b16 %v578, %v576
          %v585 = vpack.c.b16 %v579, %v577
          %v586 = vpack.c.b16 %v582, %v580
          %v587 = vpack.c.b16 %v583, %v581
          %vm592 = vcmask 261120
          %v594 = vsel %vm592, %v567, 0
          %596 = vmatprep.subr.bf16.mxu0 %v585
          %597 = vmatpush1.bf16.msra.mxu0 %v584
          %598 = vmatprep.subr.bf16.mxu0 %v587
          %599 = vmatpush1.bf16.msra.mxu0 %v586
          %600 = vmatprep.subr.bf16.mxu0 0
          %601 = vmatpush1.bf16.msra.mxu0 0
          %602 = vmatprep.subr.bf16.mxu0 0
          %603 = vmatpush1.bf16.msra.mxu0 0
          %604 = vmatprep.subr.bf16.mxu0 0
          %605 = vmatpush1.bf16.msra.mxu0 0
          %606 = vmatprep.subr.bf16.mxu0 0
          %607 = vmatpush1.bf16.msra.mxu0 0
          %608 = vmatprep.subr.bf16.mxu0 0
          %609 = vmatpush1.bf16.msra.mxu0 0
          %610 = vmatprep.subr.bf16.mxu0 0
          %611 = vmatpush1.bf16.msra.mxu0 0
          %612 = vmatprep.subr.bf16.mxu0 0
          %613 = vmatpush1.bf16.msra.mxu0 0
          %614 = vmatprep.subr.bf16.mxu0 0
          %615 = vmatpush1.bf16.msra.mxu0 0
          %616 = vmatprep.subr.bf16.mxu0 0
          %617 = vmatpush1.bf16.msra.mxu0 0
          %618 = vmatprep.subr.bf16.mxu0 0
          %619 = vmatpush1.bf16.msra.mxu0 0
          %620 = vmatprep.subr.bf16.mxu0 0
          %621 = vmatpush1.bf16.msra.mxu0 0
          %622 = vmatprep.subr.bf16.mxu0 0
          %623 = vmatpush1.bf16.msra.mxu0 0
          %624 = vmatprep.subr.bf16.mxu0 0
          %625 = vmatpush1.bf16.msra.mxu0 0
          %626 = vmatprep.subr.bf16.mxu0 0
          %627 = vmatpush1.bf16.msra.mxu0 0
          %628 = vmatprep.mubr.bf16.mxu0 0
          %629 = vmatmul.mubr.bf16.gmra.mrb[0].mxu0 %v594
          %v630 = vpop.f32.mrb[0].mxu0
          %v631 = vadd.f32 0.0, %v630
          %v632 = vpop.f32.mrb[0].mxu0
          %v633 = vadd.f32 0.0, %v632
          %v634 = vpop.f32.mrb[0].mxu0
          %v635 = vpop.f32.mrb[0].mxu0
          %636 = vdwg.mxu0
          %v637 = vld [vmem:[%s522] sm:$0xf]
          %v638 = vld [vmem:[%s522 + $0x4] sm:$0xf]
          %v639 = vld [vmem:[%s522 + $0x8] sm:$0xf]
          %v640 = vld [vmem:[%s522 + $0xc] sm:$0xf]
          %v641 = vld [vmem:[%s522 + $0x10] sm:$0xf]
          %v642 = vld [vmem:[%s522 + $0x14] sm:$0xf]
          %v643 = vld [vmem:[%s522 + $0x18] sm:$0xf]
          %v644 = vld [vmem:[%s522 + $0x1c] sm:$0xf]
          %v645 = vld [vmem:[%s522 + $0x20] sm:$0xf]
          %v646 = vld [vmem:[%s522 + $0x24] sm:$0xf]
          %v647 = vld [vmem:[%s522 + $0x28] sm:$0xf]
          %v648 = vld [vmem:[%s522 + $0x2c] sm:$0xf]
          %v649 = vld [vmem:[%s522 + $0x30] sm:$0xf]
          %v650 = vld [vmem:[%s522 + $0x34] sm:$0xf]
          %v651 = vld [vmem:[%s522 + $0x38] sm:$0xf]
          %v652 = vld [vmem:[%s522 + $0x3c] sm:$0xf]
          %v653 = vld [vmem:[%s522 + $0x40] sm:$0xf]
          %v654 = vld [vmem:[%s522 + $0x44] sm:$0xf]
          %v655 = vld [vmem:[%s522 + $0x48] sm:$0xf]
          %v656 = vld [vmem:[%s522 + $0x4c] sm:$0xf]
          %v657 = vld [vmem:[%s522 + $0x50] sm:$0xf]
          %v658 = vld [vmem:[%s522 + $0x54] sm:$0xf]
          %v659 = vld [vmem:[%s522 + $0x58] sm:$0xf]
          %v660 = vld [vmem:[%s522 + $0x5c] sm:$0xf]
          %v661 = vld [vmem:[%s522 + $0x60] sm:$0xf]
          %v662 = vld [vmem:[%s522 + $0x64] sm:$0xf]
          %v663 = vld [vmem:[%s522 + $0x68] sm:$0xf]
          %v664 = vld [vmem:[%s522 + $0x6c] sm:$0xf]
          %v665 = vld [vmem:[%s522 + $0x70] sm:$0xf]
          %v666 = vld [vmem:[%s522 + $0x74] sm:$0xf]
          %v667 = vld [vmem:[%s522 + $0x78] sm:$0xf]
          %v668 = vld [vmem:[%s522 + $0x7c] sm:$0xf]
          %v669 = vunpack.c.l.bf16 %v637
          %v670 = vunpack.c.l.bf16 %v638
          %v671 = vunpack.c.l.bf16 %v639
          %v672 = vunpack.c.l.bf16 %v640
          %v673 = vunpack.c.l.bf16 %v641
          %v674 = vunpack.c.l.bf16 %v642
          %v675 = vunpack.c.l.bf16 %v643
          %v676 = vunpack.c.l.bf16 %v644
          %v677 = vunpack.c.l.bf16 %v645
          %v678 = vunpack.c.l.bf16 %v646
          %v679 = vunpack.c.l.bf16 %v647
          %v680 = vunpack.c.l.bf16 %v648
          %v681 = vunpack.c.l.bf16 %v649
          %v682 = vunpack.c.l.bf16 %v650
          %v683 = vunpack.c.l.bf16 %v651
          %v684 = vunpack.c.l.bf16 %v652
          %v685 = vunpack.c.l.bf16 %v653
          %v686 = vunpack.c.l.bf16 %v654
          %v687 = vunpack.c.l.bf16 %v655
          %v688 = vunpack.c.l.bf16 %v656
          %v689 = vunpack.c.l.bf16 %v657
          %v690 = vunpack.c.l.bf16 %v658
          %v691 = vunpack.c.l.bf16 %v659
          %v692 = vunpack.c.l.bf16 %v660
          %v693 = vunpack.c.l.bf16 %v661
          %v694 = vunpack.c.l.bf16 %v662
          %v695 = vunpack.c.l.bf16 %v663
          %v696 = vunpack.c.l.bf16 %v664
          %v697 = vunpack.c.l.bf16 %v665
          %v698 = vunpack.c.l.bf16 %v666
          %v699 = vunpack.c.l.bf16 %v667
          %v700 = vunpack.c.l.bf16 %v668
          %v701 = vlaneseq
          %v702 = vshrl.u32 %v701, 7
          %v703 = vsub.s32 0, %v702
          %v704 = vrot.slane %v633, %v703
          %706 = vbcast.lane.b32.xlu0 %v704, 256
          %v707 = vpop.permute.xlu0 %706
          %s709 = sor.u32 256, 8
          %710 = vbcast.lane.b32.xlu0 %v704, %s709
          %v711 = vpop.permute.xlu0 %710
          %s713 = sor.u32 256, 16
          %714 = vbcast.lane.b32.xlu0 %v704, %s713
          %v715 = vpop.permute.xlu0 %714
          %s717 = sor.u32 256, 24
          %718 = vbcast.lane.b32.xlu0 %v704, %s717
          %v719 = vpop.permute.xlu0 %718
          %v720 = vlaneseq
          %v721 = vshrl.u32 %v720, 7
          %v722 = vsub.s32 1, %v721
          %v723 = vrot.slane %v633, %v722
          %725 = vbcast.lane.b32.xlu0 %v723, 256
          %v726 = vpop.permute.xlu0 %725
          %s728 = sor.u32 256, 8
          %729 = vbcast.lane.b32.xlu0 %v723, %s728
          %v730 = vpop.permute.xlu0 %729
          %s732 = sor.u32 256, 16
          %733 = vbcast.lane.b32.xlu0 %v723, %s732
          %v734 = vpop.permute.xlu0 %733
          %s736 = sor.u32 256, 24
          %737 = vbcast.lane.b32.xlu0 %v723, %s736
          %v738 = vpop.permute.xlu0 %737
          %v739 = vlaneseq
          %v740 = vshrl.u32 %v739, 7
          %v741 = vsub.s32 2, %v740
          %v742 = vrot.slane %v633, %v741
          %744 = vbcast.lane.b32.xlu0 %v742, 256
          %v745 = vpop.permute.xlu0 %744
          %s747 = sor.u32 256, 8
          %748 = vbcast.lane.b32.xlu0 %v742, %s747
          %v749 = vpop.permute.xlu0 %748
          %s751 = sor.u32 256, 16
          %752 = vbcast.lane.b32.xlu0 %v742, %s751
          %v753 = vpop.permute.xlu0 %752
          %s755 = sor.u32 256, 24
          %756 = vbcast.lane.b32.xlu0 %v742, %s755
          %v757 = vpop.permute.xlu0 %756
          %v758 = vlaneseq
          %v759 = vshrl.u32 %v758, 7
          %v760 = vsub.s32 3, %v759
          %v761 = vrot.slane %v633, %v760
          %763 = vbcast.lane.b32.xlu0 %v761, 256
          %v764 = vpop.permute.xlu0 %763
          %s766 = sor.u32 256, 8
          %767 = vbcast.lane.b32.xlu0 %v761, %s766
          %v768 = vpop.permute.xlu0 %767
          %s770 = sor.u32 256, 16
          %771 = vbcast.lane.b32.xlu0 %v761, %s770
          %v772 = vpop.permute.xlu0 %771
          %s774 = sor.u32 256, 24
          %775 = vbcast.lane.b32.xlu0 %v761, %s774
          %v776 = vpop.permute.xlu0 %775
          %v777 = vlaneseq
          %v778 = vshrl.u32 %v777, 7
          %v779 = vsub.s32 4, %v778
          %v780 = vrot.slane %v633, %v779
          %782 = vbcast.lane.b32.xlu0 %v780, 256
          %v783 = vpop.permute.xlu0 %782
          %s785 = sor.u32 256, 8
          %786 = vbcast.lane.b32.xlu0 %v780, %s785
          %v787 = vpop.permute.xlu0 %786
          %s789 = sor.u32 256, 16
          %790 = vbcast.lane.b32.xlu0 %v780, %s789
          %v791 = vpop.permute.xlu0 %790
          %s793 = sor.u32 256, 24
          %794 = vbcast.lane.b32.xlu0 %v780, %s793
          %v795 = vpop.permute.xlu0 %794
          %v796 = vlaneseq
          %v797 = vshrl.u32 %v796, 7
          %v798 = vsub.s32 5, %v797
          %v799 = vrot.slane %v633, %v798
          %801 = vbcast.lane.b32.xlu0 %v799, 256
          %v802 = vpop.permute.xlu0 %801
          %s804 = sor.u32 256, 8
          %805 = vbcast.lane.b32.xlu0 %v799, %s804
          %v806 = vpop.permute.xlu0 %805
          %s808 = sor.u32 256, 16
          %809 = vbcast.lane.b32.xlu0 %v799, %s808
          %v810 = vpop.permute.xlu0 %809
          %s812 = sor.u32 256, 24
          %813 = vbcast.lane.b32.xlu0 %v799, %s812
          %v814 = vpop.permute.xlu0 %813
          %v815 = vlaneseq
          %v816 = vshrl.u32 %v815, 7
          %v817 = vsub.s32 6, %v816
          %v818 = vrot.slane %v633, %v817
          %820 = vbcast.lane.b32.xlu0 %v818, 256
          %v821 = vpop.permute.xlu0 %820
          %s823 = sor.u32 256, 8
          %824 = vbcast.lane.b32.xlu0 %v818, %s823
          %v825 = vpop.permute.xlu0 %824
          %s827 = sor.u32 256, 16
          %828 = vbcast.lane.b32.xlu0 %v818, %s827
          %v829 = vpop.permute.xlu0 %828
          %s831 = sor.u32 256, 24
          %832 = vbcast.lane.b32.xlu0 %v818, %s831
          %v833 = vpop.permute.xlu0 %832
          %v834 = vlaneseq
          %v835 = vshrl.u32 %v834, 7
          %v836 = vsub.s32 7, %v835
          %v837 = vrot.slane %v633, %v836
          %839 = vbcast.lane.b32.xlu0 %v837, 256
          %v840 = vpop.permute.xlu0 %839
          %s842 = sor.u32 256, 8
          %843 = vbcast.lane.b32.xlu0 %v837, %s842
          %v844 = vpop.permute.xlu0 %843
          %s846 = sor.u32 256, 16
          %847 = vbcast.lane.b32.xlu0 %v837, %s846
          %v848 = vpop.permute.xlu0 %847
          %s850 = sor.u32 256, 24
          %851 = vbcast.lane.b32.xlu0 %v837, %s850
          %v852 = vpop.permute.xlu0 %851
          %v853 = vadd.f32 %v669, %v707
          %v854 = vadd.f32 %v670, %v711
          %v855 = vadd.f32 %v671, %v715
          %v856 = vadd.f32 %v672, %v719
          %v857 = vadd.f32 %v673, %v726
          %v858 = vadd.f32 %v674, %v730
          %v859 = vadd.f32 %v675, %v734
          %v860 = vadd.f32 %v676, %v738
          %v861 = vadd.f32 %v677, %v745
          %v862 = vadd.f32 %v678, %v749
          %v863 = vadd.f32 %v679, %v753
          %v864 = vadd.f32 %v680, %v757
          %v865 = vadd.f32 %v681, %v764
          %v866 = vadd.f32 %v682, %v768
          %v867 = vadd.f32 %v683, %v772
          %v868 = vadd.f32 %v684, %v776
          %v869 = vadd.f32 %v685, %v783
          %v870 = vadd.f32 %v686, %v787
          %v871 = vadd.f32 %v687, %v791
          %v872 = vadd.f32 %v688, %v795
          %v873 = vadd.f32 %v689, %v802
          %v874 = vadd.f32 %v690, %v806
          %v875 = vadd.f32 %v691, %v810
          %v876 = vadd.f32 %v692, %v814
          %v877 = vadd.f32 %v693, %v821
          %v878 = vadd.f32 %v694, %v825
          %v879 = vadd.f32 %v695, %v829
          %v880 = vadd.f32 %v696, %v833
          %v881 = vadd.f32 %v697, %v840
          %v882 = vadd.f32 %v698, %v844
          %v883 = vadd.f32 %v699, %v848
          %v884 = vadd.f32 %v700, %v852
          %v885 = vmax.f32 %v853, 0.0
          %v886 = vmax.f32 %v854, 0.0
          %v887 = vmax.f32 %v855, 0.0
          %v888 = vmax.f32 %v856, 0.0
          %v889 = vmax.f32 %v857, 0.0
          %v890 = vmax.f32 %v858, 0.0
          %v891 = vmax.f32 %v859, 0.0
          %v892 = vmax.f32 %v860, 0.0
          %v893 = vmax.f32 %v861, 0.0
          %v894 = vmax.f32 %v862, 0.0
          %v895 = vmax.f32 %v863, 0.0
          %v896 = vmax.f32 %v864, 0.0
          %v897 = vmax.f32 %v865, 0.0
          %v898 = vmax.f32 %v866, 0.0
          %v899 = vmax.f32 %v867, 0.0
          %v900 = vmax.f32 %v868, 0.0
          %v901 = vmax.f32 %v869, 0.0
          %v902 = vmax.f32 %v870, 0.0
          %v903 = vmax.f32 %v871, 0.0
          %v904 = vmax.f32 %v872, 0.0
          %v905 = vmax.f32 %v873, 0.0
          %v906 = vmax.f32 %v874, 0.0
          %v907 = vmax.f32 %v875, 0.0
          %v908 = vmax.f32 %v876, 0.0
          %v909 = vmax.f32 %v877, 0.0
          %v910 = vmax.f32 %v878, 0.0
          %v911 = vmax.f32 %v879, 0.0
          %v912 = vmax.f32 %v880, 0.0
          %v913 = vmax.f32 %v881, 0.0
          %v914 = vmax.f32 %v882, 0.0
          %v915 = vmax.f32 %v883, 0.0
          %v916 = vmax.f32 %v884, 0.0
          %v917 = vld [vmem:[%s9] sm:$0x1]
          %v918 = vpack.c.bf16 %v886, %v885
          %v919 = vpack.c.bf16 %v888, %v887
          %v920 = vpack.c.bf16 %v890, %v889
          %v921 = vpack.c.bf16 %v892, %v891
          %v922 = vpack.c.bf16 %v894, %v893
          %v923 = vpack.c.bf16 %v896, %v895
          %v924 = vpack.c.bf16 %v898, %v897
          %v925 = vpack.c.bf16 %v900, %v899
          %v926 = vpack.c.bf16 %v902, %v901
          %v927 = vpack.c.bf16 %v904, %v903
          %v928 = vpack.c.bf16 %v906, %v905
          %v929 = vpack.c.bf16 %v908, %v907
          %v930 = vpack.c.bf16 %v910, %v909
          %v931 = vpack.c.bf16 %v912, %v911
          %v932 = vpack.c.bf16 %v914, %v913
          %v933 = vpack.c.bf16 %v916, %v915
          %v935 = vsel %vm592, %v917, 0
          %937 = vmatprep.subr.bf16.mxu0 0
          %938 = vmatpush1.bf16.msra.mxu0 %v918
          %939 = vmatprep.subr.bf16.mxu0 0
          %940 = vmatpush1.bf16.msra.mxu0 %v919
          %941 = vmatprep.subr.bf16.mxu0 0
          %942 = vmatpush1.bf16.msra.mxu0 0
          %943 = vmatprep.subr.bf16.mxu0 0
          %944 = vmatpush1.bf16.msra.mxu0 0
          %945 = vmatprep.subr.bf16.mxu0 0
          %946 = vmatpush1.bf16.msra.mxu0 0
          %947 = vmatprep.subr.bf16.mxu0 0
          %948 = vmatpush1.bf16.msra.mxu0 0
          %949 = vmatprep.subr.bf16.mxu0 0
          %950 = vmatpush1.bf16.msra.mxu0 0
          %951 = vmatprep.subr.bf16.mxu0 0
          %952 = vmatpush1.bf16.msra.mxu0 0
          %953 = vmatprep.subr.bf16.mxu0 0
          %954 = vmatpush1.bf16.msra.mxu0 0
          %955 = vmatprep.subr.bf16.mxu0 0
          %956 = vmatpush1.bf16.msra.mxu0 0
          %957 = vmatprep.subr.bf16.mxu0 0
          %958 = vmatpush1.bf16.msra.mxu0 0
          %959 = vmatprep.subr.bf16.mxu0 0
          %960 = vmatpush1.bf16.msra.mxu0 0
          %961 = vmatprep.subr.bf16.mxu0 0
          %962 = vmatpush1.bf16.msra.mxu0 0
          %963 = vmatprep.subr.bf16.mxu0 0
          %964 = vmatpush1.bf16.msra.mxu0 0
          %965 = vmatprep.subr.bf16.mxu0 0
          %966 = vmatpush1.bf16.msra.mxu0 0
          %967 = vmatprep.subr.bf16.mxu0 0
          %968 = vmatpush1.bf16.msra.mxu0 0
          %969 = vmatprep.mubr.bf16.mxu0 0
          %970 = vmatmul.mubr.bf16.gmra.mrb[0].mxu0 %v935
          %v971 = vpop.f32.mrb[0].mxu0
          %v972 = vadd.f32 0.0, %v971
          %v973 = vpop.f32.mrb[0].mxu0
          %v974 = vpop.f32.mrb[0].mxu0
          %v975 = vpop.f32.mrb[0].mxu0
          %976 = vdwg.mxu0
          %977 = vmatprep.subr.bf16.mxu0 0
          %978 = vmatpush1.bf16.msra.mxu0 %v920
          %979 = vmatprep.subr.bf16.mxu0 0
          %980 = vmatpush1.bf16.msra.mxu0 %v921
          %981 = vmatprep.subr.bf16.mxu0 0
          %982 = vmatpush1.bf16.msra.mxu0 0
          %983 = vmatprep.subr.bf16.mxu0 0
          %984 = vmatpush1.bf16.msra.mxu0 0
          %985 = vmatprep.subr.bf16.mxu0 0
          %986 = vmatpush1.bf16.msra.mxu0 0
          %987 = vmatprep.subr.bf16.mxu0 0
          %988 = vmatpush1.bf16.msra.mxu0 0
          %989 = vmatprep.subr.bf16.mxu0 0
          %990 = vmatpush1.bf16.msra.mxu0 0
          %991 = vmatprep.subr.bf16.mxu0 0
          %992 = vmatpush1.bf16.msra.mxu0 0
          %993 = vmatprep.subr.bf16.mxu0 0
          %994 = vmatpush1.bf16.msra.mxu0 0
          %995 = vmatprep.subr.bf16.mxu0 0
          %996 = vmatpush1.bf16.msra.mxu0 0
          %997 = vmatprep.subr.bf16.mxu0 0
          %998 = vmatpush1.bf16.msra.mxu0 0
          %999 = vmatprep.subr.bf16.mxu0 0
          %1000 = vmatpush1.bf16.msra.mxu0 0
          %1001 = vmatprep.subr.bf16.mxu0 0
          %1002 = vmatpush1.bf16.msra.mxu0 0
          %1003 = vmatprep.subr.bf16.mxu0 0
          %1004 = vmatpush1.bf16.msra.mxu0 0
          %1005 = vmatprep.subr.bf16.mxu0 0
          %1006 = vmatpush1.bf16.msra.mxu0 0
          %1007 = vmatprep.subr.bf16.mxu0 0
          %1008 = vmatpush1.bf16.msra.mxu0 0
          %1009 = vmatprep.mubr.bf16.mxu0 0
          %1010 = vmatmul.mubr.bf16.gmra.mrb[0].mxu0 %v935
          %v1011 = vpop.f32.mrb[0].mxu0
          %v1012 = vadd.f32 0.0, %v1011
          %v1013 = vpop.f32.mrb[0].mxu0
          %v1014 = vpop.f32.mrb[0].mxu0
          %v1015 = vpop.f32.mrb[0].mxu0
          %1016 = vdwg.mxu0
          %1017 = vmatprep.subr.bf16.mxu0 0
          %1018 = vmatpush1.bf16.msra.mxu0 %v922
          %1019 = vmatprep.subr.bf16.mxu0 0
          %1020 = vmatpush1.bf16.msra.mxu0 %v923
          %1021 = vmatprep.subr.bf16.mxu0 0
          %1022 = vmatpush1.bf16.msra.mxu0 0
          %1023 = vmatprep.subr.bf16.mxu0 0
          %1024 = vmatpush1.bf16.msra.mxu0 0
          %1025 = vmatprep.subr.bf16.mxu0 0
          %1026 = vmatpush1.bf16.msra.mxu0 0
          %1027 = vmatprep.subr.bf16.mxu0 0
          %1028 = vmatpush1.bf16.msra.mxu0 0
          %1029 = vmatprep.subr.bf16.mxu0 0
          %1030 = vmatpush1.bf16.msra.mxu0 0
          %1031 = vmatprep.subr.bf16.mxu0 0
          %1032 = vmatpush1.bf16.msra.mxu0 0
          %1033 = vmatprep.subr.bf16.mxu0 0
          %1034 = vmatpush1.bf16.msra.mxu0 0
          %1035 = vmatprep.subr.bf16.mxu0 0
          %1036 = vmatpush1.bf16.msra.mxu0 0
          %1037 = vmatprep.subr.bf16.mxu0 0
          %1038 = vmatpush1.bf16.msra.mxu0 0
          %1039 = vmatprep.subr.bf16.mxu0 0
          %1040 = vmatpush1.bf16.msra.mxu0 0
          %1041 = vmatprep.subr.bf16.mxu0 0
          %1042 = vmatpush1.bf16.msra.mxu0 0
          %1043 = vmatprep.subr.bf16.mxu0 0
          %1044 = vmatpush1.bf16.msra.mxu0 0
          %1045 = vmatprep.subr.bf16.mxu0 0
          %1046 = vmatpush1.bf16.msra.mxu0 0
          %1047 = vmatprep.subr.bf16.mxu0 0
          %1048 = vmatpush1.bf16.msra.mxu0 0
          %1049 = vmatprep.mubr.bf16.mxu0 0
          %1050 = vmatmul.mubr.bf16.gmra.mrb[0].mxu0 %v935
          %v1051 = vpop.f32.mrb[0].mxu0
          %v1052 = vadd.f32 0.0, %v1051
          %v1053 = vpop.f32.mrb[0].mxu0
          %v1054 = vpop.f32.mrb[0].mxu0
          %v1055 = vpop.f32.mrb[0].mxu0
          %1056 = vdwg.mxu0
          %1057 = vmatprep.subr.bf16.mxu0 0
          %1058 = vmatpush1.bf16.msra.mxu0 %v924
          %1059 = vmatprep.subr.bf16.mxu0 0
          %1060 = vmatpush1.bf16.msra.mxu0 %v925
          %1061 = vmatprep.subr.bf16.mxu0 0
          %1062 = vmatpush1.bf16.msra.mxu0 0
          %1063 = vmatprep.subr.bf16.mxu0 0
          %1064 = vmatpush1.bf16.msra.mxu0 0
          %1065 = vmatprep.subr.bf16.mxu0 0
          %1066 = vmatpush1.bf16.msra.mxu0 0
          %1067 = vmatprep.subr.bf16.mxu0 0
          %1068 = vmatpush1.bf16.msra.mxu0 0
          %1069 = vmatprep.subr.bf16.mxu0 0
          %1070 = vmatpush1.bf16.msra.mxu0 0
          %1071 = vmatprep.subr.bf16.mxu0 0
          %1072 = vmatpush1.bf16.msra.mxu0 0
          %1073 = vmatprep.subr.bf16.mxu0 0
          %1074 = vmatpush1.bf16.msra.mxu0 0
          %1075 = vmatprep.subr.bf16.mxu0 0
          %1076 = vmatpush1.bf16.msra.mxu0 0
          %1077 = vmatprep.subr.bf16.mxu0 0
          %1078 = vmatpush1.bf16.msra.mxu0 0
          %1079 = vmatprep.subr.bf16.mxu0 0
          %1080 = vmatpush1.bf16.msra.mxu0 0
          %1081 = vmatprep.subr.bf16.mxu0 0
          %1082 = vmatpush1.bf16.msra.mxu0 0
          %1083 = vmatprep.subr.bf16.mxu0 0
          %1084 = vmatpush1.bf16.msra.mxu0 0
          %1085 = vmatprep.subr.bf16.mxu0 0
          %1086 = vmatpush1.bf16.msra.mxu0 0
          %1087 = vmatprep.subr.bf16.mxu0 0
          %1088 = vmatpush1.bf16.msra.mxu0 0
          %1089 = vmatprep.mubr.bf16.mxu0 0
          %1090 = vmatmul.mubr.bf16.gmra.mrb[0].mxu0 %v935
          %v1091 = vpop.f32.mrb[0].mxu0
          %v1092 = vadd.f32 0.0, %v1091
          %v1093 = vpop.f32.mrb[0].mxu0
          %v1094 = vpop.f32.mrb[0].mxu0
          %v1095 = vpop.f32.mrb[0].mxu0
          %1096 = vdwg.mxu0
          %1097 = vmatprep.subr.bf16.mxu0 0
          %1098 = vmatpush1.bf16.msra.mxu0 %v926
          %1099 = vmatprep.subr.bf16.mxu0 0
          %1100 = vmatpush1.bf16.msra.mxu0 %v927
          %1101 = vmatprep.subr.bf16.mxu0 0
          %1102 = vmatpush1.bf16.msra.mxu0 0
          %1103 = vmatprep.subr.bf16.mxu0 0
          %1104 = vmatpush1.bf16.msra.mxu0 0
          %1105 = vmatprep.subr.bf16.mxu0 0
          %1106 = vmatpush1.bf16.msra.mxu0 0
          %1107 = vmatprep.subr.bf16.mxu0 0
          %1108 = vmatpush1.bf16.msra.mxu0 0
          %1109 = vmatprep.subr.bf16.mxu0 0
          %1110 = vmatpush1.bf16.msra.mxu0 0
          %1111 = vmatprep.subr.bf16.mxu0 0
          %1112 = vmatpush1.bf16.msra.mxu0 0
          %1113 = vmatprep.subr.bf16.mxu0 0
          %1114 = vmatpush1.bf16.msra.mxu0 0
          %1115 = vmatprep.subr.bf16.mxu0 0
          %1116 = vmatpush1.bf16.msra.mxu0 0
          %1117 = vmatprep.subr.bf16.mxu0 0
          %1118 = vmatpush1.bf16.msra.mxu0 0
          %1119 = vmatprep.subr.bf16.mxu0 0
          %1120 = vmatpush1.bf16.msra.mxu0 0
          %1121 = vmatprep.subr.bf16.mxu0 0
          %1122 = vmatpush1.bf16.msra.mxu0 0
          %1123 = vmatprep.subr.bf16.mxu0 0
          %1124 = vmatpush1.bf16.msra.mxu0 0
          %1125 = vmatprep.subr.bf16.mxu0 0
          %1126 = vmatpush1.bf16.msra.mxu0 0
          %1127 = vmatprep.subr.bf16.mxu0 0
          %1128 = vmatpush1.bf16.msra.mxu0 0
          %1129 = vmatprep.mubr.bf16.mxu0 0
          %1130 = vmatmul.mubr.bf16.gmra.mrb[0].mxu0 %v935
          %v1131 = vpop.f32.mrb[0].mxu0
          %v1132 = vadd.f32 0.0, %v1131
          %v1133 = vpop.f32.mrb[0].mxu0
          %v1134 = vpop.f32.mrb[0].mxu0
          %v1135 = vpop.f32.mrb[0].mxu0
          %1136 = vdwg.mxu0
          %1137 = vmatprep.subr.bf16.mxu0 0
          %1138 = vmatpush1.bf16.msra.mxu0 %v928
          %1139 = vmatprep.subr.bf16.mxu0 0
          %1140 = vmatpush1.bf16.msra.mxu0 %v929
          %1141 = vmatprep.subr.bf16.mxu0 0
          %1142 = vmatpush1.bf16.msra.mxu0 0
          %1143 = vmatprep.subr.bf16.mxu0 0
          %1144 = vmatpush1.bf16.msra.mxu0 0
          %1145 = vmatprep.subr.bf16.mxu0 0
          %1146 = vmatpush1.bf16.msra.mxu0 0
          %1147 = vmatprep.subr.bf16.mxu0 0
          %1148 = vmatpush1.bf16.msra.mxu0 0
          %1149 = vmatprep.subr.bf16.mxu0 0
          %1150 = vmatpush1.bf16.msra.mxu0 0
          %1151 = vmatprep.subr.bf16.mxu0 0
          %1152 = vmatpush1.bf16.msra.mxu0 0
          %1153 = vmatprep.subr.bf16.mxu0 0
          %1154 = vmatpush1.bf16.msra.mxu0 0
          %1155 = vmatprep.subr.bf16.mxu0 0
          %1156 = vmatpush1.bf16.msra.mxu0 0
          %1157 = vmatprep.subr.bf16.mxu0 0
          %1158 = vmatpush1.bf16.msra.mxu0 0
          %1159 = vmatprep.subr.bf16.mxu0 0
          %1160 = vmatpush1.bf16.msra.mxu0 0
          %1161 = vmatprep.subr.bf16.mxu0 0
          %1162 = vmatpush1.bf16.msra.mxu0 0
          %1163 = vmatprep.subr.bf16.mxu0 0
          %1164 = vmatpush1.bf16.msra.mxu0 0
          %1165 = vmatprep.subr.bf16.mxu0 0
          %1166 = vmatpush1.bf16.msra.mxu0 0
          %1167 = vmatprep.subr.bf16.mxu0 0
          %1168 = vmatpush1.bf16.msra.mxu0 0
          %1169 = vmatprep.mubr.bf16.mxu0 0
          %1170 = vmatmul.mubr.bf16.gmra.mrb[0].mxu0 %v935
          %v1171 = vpop.f32.mrb[0].mxu0
          %v1172 = vadd.f32 0.0, %v1171
          %v1173 = vpop.f32.mrb[0].mxu0
          %v1174 = vpop.f32.mrb[0].mxu0
          %v1175 = vpop.f32.mrb[0].mxu0
          %1176 = vdwg.mxu0
          %1177 = vmatprep.subr.bf16.mxu0 0
          %1178 = vmatpush1.bf16.msra.mxu0 %v930
          %1179 = vmatprep.subr.bf16.mxu0 0
          %1180 = vmatpush1.bf16.msra.mxu0 %v931
          %1181 = vmatprep.subr.bf16.mxu0 0
          %1182 = vmatpush1.bf16.msra.mxu0 0
          %1183 = vmatprep.subr.bf16.mxu0 0
          %1184 = vmatpush1.bf16.msra.mxu0 0
          %1185 = vmatprep.subr.bf16.mxu0 0
          %1186 = vmatpush1.bf16.msra.mxu0 0
          %1187 = vmatprep.subr.bf16.mxu0 0
          %1188 = vmatpush1.bf16.msra.mxu0 0
          %1189 = vmatprep.subr.bf16.mxu0 0
          %1190 = vmatpush1.bf16.msra.mxu0 0
          %1191 = vmatprep.subr.bf16.mxu0 0
          %1192 = vmatpush1.bf16.msra.mxu0 0
          %1193 = vmatprep.subr.bf16.mxu0 0
          %1194 = vmatpush1.bf16.msra.mxu0 0
          %1195 = vmatprep.subr.bf16.mxu0 0
          %1196 = vmatpush1.bf16.msra.mxu0 0
          %1197 = vmatprep.subr.bf16.mxu0 0
          %1198 = vmatpush1.bf16.msra.mxu0 0
          %1199 = vmatprep.subr.bf16.mxu0 0
          %1200 = vmatpush1.bf16.msra.mxu0 0
          %1201 = vmatprep.subr.bf16.mxu0 0
          %1202 = vmatpush1.bf16.msra.mxu0 0
          %1203 = vmatprep.subr.bf16.mxu0 0
          %1204 = vmatpush1.bf16.msra.mxu0 0
          %1205 = vmatprep.subr.bf16.mxu0 0
          %1206 = vmatpush1.bf16.msra.mxu0 0
          %1207 = vmatprep.subr.bf16.mxu0 0
          %1208 = vmatpush1.bf16.msra.mxu0 0
          %1209 = vmatprep.mubr.bf16.mxu0 0
          %1210 = vmatmul.mubr.bf16.gmra.mrb[0].mxu0 %v935
          %v1211 = vpop.f32.mrb[0].mxu0
          %v1212 = vadd.f32 0.0, %v1211
          %v1213 = vpop.f32.mrb[0].mxu0
          %v1214 = vpop.f32.mrb[0].mxu0
          %v1215 = vpop.f32.mrb[0].mxu0
          %1216 = vdwg.mxu0
          %1217 = vmatprep.subr.bf16.mxu0 0
          %1218 = vmatpush1.bf16.msra.mxu0 %v932
          %1219 = vmatprep.subr.bf16.mxu0 0
          %1220 = vmatpush1.bf16.msra.mxu0 %v933
          %1221 = vmatprep.subr.bf16.mxu0 0
          %1222 = vmatpush1.bf16.msra.mxu0 0
          %1223 = vmatprep.subr.bf16.mxu0 0
          %1224 = vmatpush1.bf16.msra.mxu0 0
          %1225 = vmatprep.subr.bf16.mxu0 0
          %1226 = vmatpush1.bf16.msra.mxu0 0
          %1227 = vmatprep.subr.bf16.mxu0 0
          %1228 = vmatpush1.bf16.msra.mxu0 0
          %1229 = vmatprep.subr.bf16.mxu0 0
          %1230 = vmatpush1.bf16.msra.mxu0 0
          %1231 = vmatprep.subr.bf16.mxu0 0
          %1232 = vmatpush1.bf16.msra.mxu0 0
          %1233 = vmatprep.subr.bf16.mxu0 0
          %1234 = vmatpush1.bf16.msra.mxu0 0
          %1235 = vmatprep.subr.bf16.mxu0 0
          %1236 = vmatpush1.bf16.msra.mxu0 0
          %1237 = vmatprep.subr.bf16.mxu0 0
          %1238 = vmatpush1.bf16.msra.mxu0 0
          %1239 = vmatprep.subr.bf16.mxu0 0
          %1240 = vmatpush1.bf16.msra.mxu0 0
          %1241 = vmatprep.subr.bf16.mxu0 0
          %1242 = vmatpush1.bf16.msra.mxu0 0
          %1243 = vmatprep.subr.bf16.mxu0 0
          %1244 = vmatpush1.bf16.msra.mxu0 0
          %1245 = vmatprep.subr.bf16.mxu0 0
          %1246 = vmatpush1.bf16.msra.mxu0 0
          %1247 = vmatprep.subr.bf16.mxu0 0
          %1248 = vmatpush1.bf16.msra.mxu0 0
          %1249 = vmatprep.mubr.bf16.mxu0 0
          %1250 = vmatmul.mubr.bf16.gmra.mrb[0].mxu0 %v935
          %v1251 = vpop.f32.mrb[0].mxu0
          %v1252 = vadd.f32 0.0, %v1251
          %v1253 = vpop.f32.mrb[0].mxu0
          %v1254 = vpop.f32.mrb[0].mxu0
          %v1255 = vpop.f32.mrb[0].mxu0
          %1256 = vdwg.mxu0
          %v1257 = vld [vmem:[%s5] sm:$0x1]
          %v1259 = vlaneseq
          %v1260 = vshrl.u32 %v1259, 7
          %v1261 = vsub.s32 0, %v1260
          %v1262 = vrot.slane %v1257, %v1261
          %v1264 = vadd.f32 %v972, %v1262
          %v1265 = vadd.f32 %v1012, %v1262
          %v1266 = vadd.f32 %v1052, %v1262
          %v1267 = vadd.f32 %v1092, %v1262
          %v1268 = vadd.f32 %v1132, %v1262
          %v1269 = vadd.f32 %v1172, %v1262
          %v1270 = vadd.f32 %v1212, %v1262
          %v1271 = vadd.f32 %v1252, %v1262
          %v1280 = vrot.slane %v1265, 7
          %vm1281 = vcmask 1041409
          %v1282 = vsel %vm1281, %v1280, %v1264
          %v1283 = vrot.slane %v1266, 6
          %vm1284 = vcmask 1042434
          %v1285 = vsel %vm1284, %v1283, %v1282
          %v1286 = vrot.slane %v1267, 5
          %vm1287 = vcmask 1043459
          %v1288 = vsel %vm1287, %v1286, %v1285
          %v1289 = vrot.slane %v1268, 4
          %vm1290 = vcmask 1044484
          %v1291 = vsel %vm1290, %v1289, %v1288
          %v1292 = vrot.slane %v1269, 3
          %vm1293 = vcmask 1045509
          %v1294 = vsel %vm1293, %v1292, %v1291
          %v1295 = vrot.slane %v1270, 2
          %vm1296 = vcmask 1046534
          %v1297 = vsel %vm1296, %v1295, %v1294
          %v1298 = vrot.slane %v1271, 1
          %vm1299 = vcmask 1047559
          %v1300 = vsel %vm1299, %v1298, %v1297
          %1302 = vmax.xlane.f32.xlu0 %v1300
          %v1303 = vpop.xlane.xlu0 %1302
          %v1305 = vrot.slane %v1303, 1
          %v1306 = vrot.slane %v1303, 2
          %v1307 = vrot.slane %v1303, 3
          %v1308 = vrot.slane %v1303, 4
          %v1309 = vrot.slane %v1303, 5
          %v1310 = vrot.slane %v1303, 6
          %v1311 = vrot.slane %v1303, 7
          %v1320 = vsub.f32 %v1264, %v1303
          %v1321 = vsub.f32 %v1265, %v1305
          %v1322 = vsub.f32 %v1266, %v1306
          %v1323 = vsub.f32 %v1267, %v1307
          %v1324 = vsub.f32 %v1268, %v1308
          %v1325 = vsub.f32 %v1269, %v1309
          %v1326 = vsub.f32 %v1270, %v1310
          %v1327 = vsub.f32 %v1271, %v1311
          %v1328 = vmul.f32 %v1320, 1.442695
          %v1329 = vpow.pop %v1328
          %v1330 = vmul.f32 %v1321, 1.442695
          %v1331 = vpow.pop %v1330
          %v1332 = vmul.f32 %v1322, 1.442695
          %v1333 = vpow.pop %v1332
          %v1334 = vmul.f32 %v1323, 1.442695
          %v1335 = vpow.pop %v1334
          %v1336 = vmul.f32 %v1324, 1.442695
          %v1337 = vpow.pop %v1336
          %v1338 = vmul.f32 %v1325, 1.442695
          %v1339 = vpow.pop %v1338
          %v1340 = vmul.f32 %v1326, 1.442695
          %v1341 = vpow.pop %v1340
          %v1342 = vmul.f32 %v1327, 1.442695
          %v1343 = vpow.pop %v1342
          %v1352 = vrot.slane %v1331, 7
          %v1353 = vsel %vm1281, %v1352, %v1329
          %v1354 = vrot.slane %v1333, 6
          %v1355 = vsel %vm1284, %v1354, %v1353
          %v1356 = vrot.slane %v1335, 5
          %v1357 = vsel %vm1287, %v1356, %v1355
          %v1358 = vrot.slane %v1337, 4
          %v1359 = vsel %vm1290, %v1358, %v1357
          %v1360 = vrot.slane %v1339, 3
          %v1361 = vsel %vm1293, %v1360, %v1359
          %v1362 = vrot.slane %v1341, 2
          %v1363 = vsel %vm1296, %v1362, %v1361
          %v1364 = vrot.slane %v1343, 1
          %v1365 = vsel %vm1299, %v1364, %v1363
          %1367 = vadd.xlane.f32.xlu0 %v1365
          %v1368 = vpop.xlane.xlu0 %1367
          %v1369 = vrcp.pop %v1368
          %v1371 = vrot.slane %v1369, 1
          %v1372 = vrot.slane %v1369, 2
          %v1373 = vrot.slane %v1369, 3
          %v1374 = vrot.slane %v1369, 4
          %v1375 = vrot.slane %v1369, 5
          %v1376 = vrot.slane %v1369, 6
          %v1377 = vrot.slane %v1369, 7
          %v1386 = vmul.f32 %v1329, %v1369
          %v1387 = vmul.f32 %v1331, %v1371
          %v1388 = vmul.f32 %v1333, %v1372
          %v1389 = vmul.f32 %v1335, %v1373
          %v1390 = vmul.f32 %v1337, %v1374
          %v1391 = vmul.f32 %v1339, %v1375
          %v1392 = vmul.f32 %v1341, %v1376
          %v1393 = vmul.f32 %v1343, %v1377
          %v1394 = vpack.c.bf16 %v1386, %v1386
          %v1395 = vpack.c.bf16 %v1387, %v1387
          %v1396 = vpack.c.bf16 %v1388, %v1388
          %v1397 = vpack.c.bf16 %v1389, %v1389
          %v1398 = vpack.c.bf16 %v1390, %v1390
          %v1399 = vpack.c.bf16 %v1391, %v1391
          %v1400 = vpack.c.bf16 %v1392, %v1392
          %v1401 = vpack.c.bf16 %v1393, %v1393
          %v1402 = vld [vmem:[%s529] sm:$0xf]
          %v1403 = vld [vmem:[%s529 + $0x4] sm:$0xf]
          %v1404 = vld [vmem:[%s529 + $0x8] sm:$0xf]
          %v1405 = vld [vmem:[%s529 + $0xc] sm:$0xf]
          %v1406 = vld [vmem:[%s529 + $0x10] sm:$0xf]
          %v1407 = vld [vmem:[%s529 + $0x14] sm:$0xf]
          %v1408 = vld [vmem:[%s529 + $0x18] sm:$0xf]
          %v1409 = vld [vmem:[%s529 + $0x1c] sm:$0xf]
          %v1410 = vld [vmem:[%s529 + $0x20] sm:$0xf]
          %v1411 = vld [vmem:[%s529 + $0x24] sm:$0xf]
          %v1412 = vld [vmem:[%s529 + $0x28] sm:$0xf]
          %v1413 = vld [vmem:[%s529 + $0x2c] sm:$0xf]
          %v1414 = vld [vmem:[%s529 + $0x30] sm:$0xf]
          %v1415 = vld [vmem:[%s529 + $0x34] sm:$0xf]
          %v1416 = vld [vmem:[%s529 + $0x38] sm:$0xf]
          %v1417 = vld [vmem:[%s529 + $0x3c] sm:$0xf]
          %v1418 = vld [vmem:[%s529 + $0x40] sm:$0xf]
          %v1419 = vld [vmem:[%s529 + $0x44] sm:$0xf]
          %v1420 = vld [vmem:[%s529 + $0x48] sm:$0xf]
          %v1421 = vld [vmem:[%s529 + $0x4c] sm:$0xf]
          %v1422 = vld [vmem:[%s529 + $0x50] sm:$0xf]
          %v1423 = vld [vmem:[%s529 + $0x54] sm:$0xf]
          %v1424 = vld [vmem:[%s529 + $0x58] sm:$0xf]
          %v1425 = vld [vmem:[%s529 + $0x5c] sm:$0xf]
          %v1426 = vld [vmem:[%s529 + $0x60] sm:$0xf]
          %v1427 = vld [vmem:[%s529 + $0x64] sm:$0xf]
          %v1428 = vld [vmem:[%s529 + $0x68] sm:$0xf]
          %v1429 = vld [vmem:[%s529 + $0x6c] sm:$0xf]
          %v1430 = vld [vmem:[%s529 + $0x70] sm:$0xf]
          %v1431 = vld [vmem:[%s529 + $0x74] sm:$0xf]
          %v1432 = vld [vmem:[%s529 + $0x78] sm:$0xf]
          %v1433 = vld [vmem:[%s529 + $0x7c] sm:$0xf]
          %v1434 = vld [vmem:[%s529 + $0x80] sm:$0xf]
          %v1435 = vld [vmem:[%s529 + $0x84] sm:$0xf]
          %v1436 = vld [vmem:[%s529 + $0x88] sm:$0xf]
          %v1437 = vld [vmem:[%s529 + $0x8c] sm:$0xf]
          %v1438 = vld [vmem:[%s529 + $0x90] sm:$0xf]
          %v1439 = vld [vmem:[%s529 + $0x94] sm:$0xf]
          %v1440 = vld [vmem:[%s529 + $0x98] sm:$0xf]
          %v1441 = vld [vmem:[%s529 + $0x9c] sm:$0xf]
          %v1442 = vld [vmem:[%s529 + $0xa0] sm:$0xf]
          %v1443 = vld [vmem:[%s529 + $0xa4] sm:$0xf]
          %v1444 = vld [vmem:[%s529 + $0xa8] sm:$0xf]
          %v1445 = vld [vmem:[%s529 + $0xac] sm:$0xf]
          %v1446 = vld [vmem:[%s529 + $0xb0] sm:$0xf]
          %v1447 = vld [vmem:[%s529 + $0xb4] sm:$0xf]
          %v1448 = vld [vmem:[%s529 + $0xb8] sm:$0xf]
          %v1449 = vld [vmem:[%s529 + $0xbc] sm:$0xf]
          %v1450 = vld [vmem:[%s529 + $0xc0] sm:$0xf]
          %v1451 = vld [vmem:[%s529 + $0xc4] sm:$0xf]
          %v1452 = vld [vmem:[%s529 + $0xc8] sm:$0xf]
          %v1453 = vld [vmem:[%s529 + $0xcc] sm:$0xf]
          %v1454 = vld [vmem:[%s529 + $0xd0] sm:$0xf]
          %v1455 = vld [vmem:[%s529 + $0xd4] sm:$0xf]
          %v1456 = vld [vmem:[%s529 + $0xd8] sm:$0xf]
          %v1457 = vld [vmem:[%s529 + $0xdc] sm:$0xf]
          %v1458 = vld [vmem:[%s529 + $0xe0] sm:$0xf]
          %v1459 = vld [vmem:[%s529 + $0xe4] sm:$0xf]
          %v1460 = vld [vmem:[%s529 + $0xe8] sm:$0xf]
          %v1461 = vld [vmem:[%s529 + $0xec] sm:$0xf]
          %v1462 = vld [vmem:[%s529 + $0xf0] sm:$0xf]
          %v1463 = vld [vmem:[%s529 + $0xf4] sm:$0xf]
          %v1464 = vld [vmem:[%s529 + $0xf8] sm:$0xf]
          %v1465 = vld [vmem:[%s529 + $0xfc] sm:$0xf]
          %v1466 = vld [vmem:[%s529 + $0x100] sm:$0xf]
          %v1467 = vld [vmem:[%s529 + $0x104] sm:$0xf]
          %v1468 = vld [vmem:[%s529 + $0x108] sm:$0xf]
          %v1469 = vld [vmem:[%s529 + $0x10c] sm:$0xf]
          %v1470 = vld [vmem:[%s529 + $0x110] sm:$0xf]
          %v1471 = vld [vmem:[%s529 + $0x114] sm:$0xf]
          %v1472 = vld [vmem:[%s529 + $0x118] sm:$0xf]
          %v1473 = vld [vmem:[%s529 + $0x11c] sm:$0xf]
          %v1474 = vld [vmem:[%s529 + $0x120] sm:$0xf]
          %v1475 = vld [vmem:[%s529 + $0x124] sm:$0xf]
          %v1476 = vld [vmem:[%s529 + $0x128] sm:$0xf]
          %v1477 = vld [vmem:[%s529 + $0x12c] sm:$0xf]
          %v1478 = vld [vmem:[%s529 + $0x130] sm:$0xf]
          %v1479 = vld [vmem:[%s529 + $0x134] sm:$0xf]
          %v1480 = vld [vmem:[%s529 + $0x138] sm:$0xf]
          %v1481 = vld [vmem:[%s529 + $0x13c] sm:$0xf]
          %v1482 = vld [vmem:[%s529 + $0x140] sm:$0xf]
          %v1483 = vld [vmem:[%s529 + $0x144] sm:$0xf]
          %v1484 = vld [vmem:[%s529 + $0x148] sm:$0xf]
          %v1485 = vld [vmem:[%s529 + $0x14c] sm:$0xf]
          %v1486 = vld [vmem:[%s529 + $0x150] sm:$0xf]
          %v1487 = vld [vmem:[%s529 + $0x154] sm:$0xf]
          %v1488 = vld [vmem:[%s529 + $0x158] sm:$0xf]
          %v1489 = vld [vmem:[%s529 + $0x15c] sm:$0xf]
          %v1490 = vld [vmem:[%s529 + $0x160] sm:$0xf]
          %v1491 = vld [vmem:[%s529 + $0x164] sm:$0xf]
          %v1492 = vld [vmem:[%s529 + $0x168] sm:$0xf]
          %v1493 = vld [vmem:[%s529 + $0x16c] sm:$0xf]
          %v1494 = vld [vmem:[%s529 + $0x170] sm:$0xf]
          %v1495 = vld [vmem:[%s529 + $0x174] sm:$0xf]
          %v1496 = vld [vmem:[%s529 + $0x178] sm:$0xf]
          %v1497 = vld [vmem:[%s529 + $0x17c] sm:$0xf]
          %v1498 = vld [vmem:[%s529 + $0x180] sm:$0xf]
          %v1499 = vld [vmem:[%s529 + $0x184] sm:$0xf]
          %v1500 = vld [vmem:[%s529 + $0x188] sm:$0xf]
          %v1501 = vld [vmem:[%s529 + $0x18c] sm:$0xf]
          %v1502 = vld [vmem:[%s529 + $0x190] sm:$0xf]
          %v1503 = vld [vmem:[%s529 + $0x194] sm:$0xf]
          %v1504 = vld [vmem:[%s529 + $0x198] sm:$0xf]
          %v1505 = vld [vmem:[%s529 + $0x19c] sm:$0xf]
          %v1506 = vld [vmem:[%s529 + $0x1a0] sm:$0xf]
          %v1507 = vld [vmem:[%s529 + $0x1a4] sm:$0xf]
          %v1508 = vld [vmem:[%s529 + $0x1a8] sm:$0xf]
          %v1509 = vld [vmem:[%s529 + $0x1ac] sm:$0xf]
          %v1510 = vld [vmem:[%s529 + $0x1b0] sm:$0xf]
          %v1511 = vld [vmem:[%s529 + $0x1b4] sm:$0xf]
          %v1512 = vld [vmem:[%s529 + $0x1b8] sm:$0xf]
          %v1513 = vld [vmem:[%s529 + $0x1bc] sm:$0xf]
          %v1514 = vld [vmem:[%s529 + $0x1c0] sm:$0xf]
          %v1515 = vld [vmem:[%s529 + $0x1c4] sm:$0xf]
          %v1516 = vld [vmem:[%s529 + $0x1c8] sm:$0xf]
          %v1517 = vld [vmem:[%s529 + $0x1cc] sm:$0xf]
          %v1518 = vld [vmem:[%s529 + $0x1d0] sm:$0xf]
          %v1519 = vld [vmem:[%s529 + $0x1d4] sm:$0xf]
          %v1520 = vld [vmem:[%s529 + $0x1d8] sm:$0xf]
          %v1521 = vld [vmem:[%s529 + $0x1dc] sm:$0xf]
          %v1522 = vld [vmem:[%s529 + $0x1e0] sm:$0xf]
          %v1523 = vld [vmem:[%s529 + $0x1e4] sm:$0xf]
          %v1524 = vld [vmem:[%s529 + $0x1e8] sm:$0xf]
          %v1525 = vld [vmem:[%s529 + $0x1ec] sm:$0xf]
          %v1526 = vld [vmem:[%s529 + $0x1f0] sm:$0xf]
          %v1527 = vld [vmem:[%s529 + $0x1f4] sm:$0xf]
          %v1528 = vld [vmem:[%s529 + $0x1f8] sm:$0xf]
          %v1529 = vld [vmem:[%s529 + $0x1fc] sm:$0xf]
          %v1546 = vunpack.c.l.b16 %v1402
          %v1547 = vunpack.c.l.b16 %v1403
          %v1548 = vunpack.c.l.b16 %v1404
          %v1549 = vunpack.c.l.b16 %v1405
          %v1550 = vunpack.c.l.b16 %v1406
          %v1551 = vunpack.c.l.b16 %v1407
          %v1552 = vunpack.c.l.b16 %v1408
          %v1553 = vunpack.c.l.b16 %v1409
          %v1554 = vunpack.c.l.b16 %v1410
          %v1555 = vunpack.c.l.b16 %v1411
          %v1556 = vunpack.c.l.b16 %v1412
          %v1557 = vunpack.c.l.b16 %v1413
          %v1558 = vunpack.c.l.b16 %v1414
          %v1559 = vunpack.c.l.b16 %v1415
          %v1560 = vunpack.c.l.b16 %v1416
          %v1561 = vunpack.c.l.b16 %v1417
          %v1562 = vpack.c.b16 %v1547, %v1546
          %v1563 = vpack.c.b16 %v1549, %v1548
          %v1564 = vpack.c.b16 %v1551, %v1550
          %v1565 = vpack.c.b16 %v1553, %v1552
          %v1566 = vpack.c.b16 %v1555, %v1554
          %v1567 = vpack.c.b16 %v1557, %v1556
          %v1568 = vpack.c.b16 %v1559, %v1558
          %v1569 = vpack.c.b16 %v1561, %v1560
          %1578 = vmatprep.subr.bf16.mxu0 0
          %1579 = vmatpush1.bf16.msra.mxu0 %v1562
          %1580 = vmatprep.subr.bf16.mxu0 0
          %1581 = vmatpush1.bf16.msra.mxu0 %v1563
          %1582 = vmatprep.subr.bf16.mxu0 0
          %1583 = vmatpush1.bf16.msra.mxu0 %v1564
          %1584 = vmatprep.subr.bf16.mxu0 0
          %1585 = vmatpush1.bf16.msra.mxu0 %v1565
          %1586 = vmatprep.subr.bf16.mxu0 0
          %1587 = vmatpush1.bf16.msra.mxu0 %v1566
          %1588 = vmatprep.subr.bf16.mxu0 0
          %1589 = vmatpush1.bf16.msra.mxu0 %v1567
          %1590 = vmatprep.subr.bf16.mxu0 0
          %1591 = vmatpush1.bf16.msra.mxu0 %v1568
          %1592 = vmatprep.subr.bf16.mxu0 0
          %1593 = vmatpush1.bf16.msra.mxu0 %v1569
          %1594 = vmatprep.subr.bf16.mxu0 0
          %1595 = vmatpush1.bf16.msra.mxu0 0
          %1596 = vmatprep.subr.bf16.mxu0 0
          %1597 = vmatpush1.bf16.msra.mxu0 0
          %1598 = vmatprep.subr.bf16.mxu0 0
          %1599 = vmatpush1.bf16.msra.mxu0 0
          %1600 = vmatprep.subr.bf16.mxu0 0
          %1601 = vmatpush1.bf16.msra.mxu0 0
          %1602 = vmatprep.subr.bf16.mxu0 0
          %1603 = vmatpush1.bf16.msra.mxu0 0
          %1604 = vmatprep.subr.bf16.mxu0 0
          %1605 = vmatpush1.bf16.msra.mxu0 0
          %1606 = vmatprep.subr.bf16.mxu0 0
          %1607 = vmatpush1.bf16.msra.mxu0 0
          %1608 = vmatprep.subr.bf16.mxu0 0
          %1609 = vmatpush1.bf16.msra.mxu0 0
          %1610 = vmatprep.mubr.bf16.mxu0 0
          %1611 = vmatmul.mubr.bf16.gmra.mrb[0].mxu0 %v1394
          %v1612 = vpop.f32.mrb[0].mxu0
          %v1613 = vadd.f32 0.0, %v1612
          %v1614 = vpop.f32.mrb[0].mxu0
          %v1615 = vpop.f32.mrb[0].mxu0
          %v1616 = vpop.f32.mrb[0].mxu0
          %1617 = vdwg.mxu0
          %v1634 = vunpack.c.l.b16 %v1418
          %v1635 = vunpack.c.l.b16 %v1419
          %v1636 = vunpack.c.l.b16 %v1420
          %v1637 = vunpack.c.l.b16 %v1421
          %v1638 = vunpack.c.l.b16 %v1422
          %v1639 = vunpack.c.l.b16 %v1423
          %v1640 = vunpack.c.l.b16 %v1424
          %v1641 = vunpack.c.l.b16 %v1425
          %v1642 = vunpack.c.l.b16 %v1426
          %v1643 = vunpack.c.l.b16 %v1427
          %v1644 = vunpack.c.l.b16 %v1428
          %v1645 = vunpack.c.l.b16 %v1429
          %v1646 = vunpack.c.l.b16 %v1430
          %v1647 = vunpack.c.l.b16 %v1431
          %v1648 = vunpack.c.l.b16 %v1432
          %v1649 = vunpack.c.l.b16 %v1433
          %v1650 = vpack.c.b16 %v1635, %v1634
          %v1651 = vpack.c.b16 %v1637, %v1636
          %v1652 = vpack.c.b16 %v1639, %v1638
          %v1653 = vpack.c.b16 %v1641, %v1640
          %v1654 = vpack.c.b16 %v1643, %v1642
          %v1655 = vpack.c.b16 %v1645, %v1644
          %v1656 = vpack.c.b16 %v1647, %v1646
          %v1657 = vpack.c.b16 %v1649, %v1648
          %1666 = vmatprep.subr.bf16.mxu0 0
          %1667 = vmatpush1.bf16.msra.mxu0 %v1650
          %1668 = vmatprep.subr.bf16.mxu0 0
          %1669 = vmatpush1.bf16.msra.mxu0 %v1651
          %1670 = vmatprep.subr.bf16.mxu0 0
          %1671 = vmatpush1.bf16.msra.mxu0 %v1652
          %1672 = vmatprep.subr.bf16.mxu0 0
          %1673 = vmatpush1.bf16.msra.mxu0 %v1653
          %1674 = vmatprep.subr.bf16.mxu0 0
          %1675 = vmatpush1.bf16.msra.mxu0 %v1654
          %1676 = vmatprep.subr.bf16.mxu0 0
          %1677 = vmatpush1.bf16.msra.mxu0 %v1655
          %1678 = vmatprep.subr.bf16.mxu0 0
          %1679 = vmatpush1.bf16.msra.mxu0 %v1656
          %1680 = vmatprep.subr.bf16.mxu0 0
          %1681 = vmatpush1.bf16.msra.mxu0 %v1657
          %1682 = vmatprep.subr.bf16.mxu0 0
          %1683 = vmatpush1.bf16.msra.mxu0 0
          %1684 = vmatprep.subr.bf16.mxu0 0
          %1685 = vmatpush1.bf16.msra.mxu0 0
          %1686 = vmatprep.subr.bf16.mxu0 0
          %1687 = vmatpush1.bf16.msra.mxu0 0
          %1688 = vmatprep.subr.bf16.mxu0 0
          %1689 = vmatpush1.bf16.msra.mxu0 0
          %1690 = vmatprep.subr.bf16.mxu0 0
          %1691 = vmatpush1.bf16.msra.mxu0 0
          %1692 = vmatprep.subr.bf16.mxu0 0
          %1693 = vmatpush1.bf16.msra.mxu0 0
          %1694 = vmatprep.subr.bf16.mxu0 0
          %1695 = vmatpush1.bf16.msra.mxu0 0
          %1696 = vmatprep.subr.bf16.mxu0 0
          %1697 = vmatpush1.bf16.msra.mxu0 0
          %1698 = vmatprep.mubr.bf16.mxu0 0
          %1699 = vmatmul.mubr.bf16.gmra.mrb[0].mxu0 %v1395
          %v1700 = vpop.f32.mrb[0].mxu0
          %v1701 = vadd.f32 0.0, %v1700
          %v1702 = vpop.f32.mrb[0].mxu0
          %v1703 = vpop.f32.mrb[0].mxu0
          %v1704 = vpop.f32.mrb[0].mxu0
          %1705 = vdwg.mxu0
          %v1722 = vunpack.c.l.b16 %v1434
          %v1723 = vunpack.c.l.b16 %v1435
          %v1724 = vunpack.c.l.b16 %v1436
          %v1725 = vunpack.c.l.b16 %v1437
          %v1726 = vunpack.c.l.b16 %v1438
          %v1727 = vunpack.c.l.b16 %v1439
          %v1728 = vunpack.c.l.b16 %v1440
          %v1729 = vunpack.c.l.b16 %v1441
          %v1730 = vunpack.c.l.b16 %v1442
          %v1731 = vunpack.c.l.b16 %v1443
          %v1732 = vunpack.c.l.b16 %v1444
          %v1733 = vunpack.c.l.b16 %v1445
          %v1734 = vunpack.c.l.b16 %v1446
          %v1735 = vunpack.c.l.b16 %v1447
          %v1736 = vunpack.c.l.b16 %v1448
          %v1737 = vunpack.c.l.b16 %v1449
          %v1738 = vpack.c.b16 %v1723, %v1722
          %v1739 = vpack.c.b16 %v1725, %v1724
          %v1740 = vpack.c.b16 %v1727, %v1726
          %v1741 = vpack.c.b16 %v1729, %v1728
          %v1742 = vpack.c.b16 %v1731, %v1730
          %v1743 = vpack.c.b16 %v1733, %v1732
          %v1744 = vpack.c.b16 %v1735, %v1734
          %v1745 = vpack.c.b16 %v1737, %v1736
          %1754 = vmatprep.subr.bf16.mxu0 0
          %1755 = vmatpush1.bf16.msra.mxu0 %v1738
          %1756 = vmatprep.subr.bf16.mxu0 0
          %1757 = vmatpush1.bf16.msra.mxu0 %v1739
          %1758 = vmatprep.subr.bf16.mxu0 0
          %1759 = vmatpush1.bf16.msra.mxu0 %v1740
          %1760 = vmatprep.subr.bf16.mxu0 0
          %1761 = vmatpush1.bf16.msra.mxu0 %v1741
          %1762 = vmatprep.subr.bf16.mxu0 0
          %1763 = vmatpush1.bf16.msra.mxu0 %v1742
          %1764 = vmatprep.subr.bf16.mxu0 0
          %1765 = vmatpush1.bf16.msra.mxu0 %v1743
          %1766 = vmatprep.subr.bf16.mxu0 0
          %1767 = vmatpush1.bf16.msra.mxu0 %v1744
          %1768 = vmatprep.subr.bf16.mxu0 0
          %1769 = vmatpush1.bf16.msra.mxu0 %v1745
          %1770 = vmatprep.subr.bf16.mxu0 0
          %1771 = vmatpush1.bf16.msra.mxu0 0
          %1772 = vmatprep.subr.bf16.mxu0 0
          %1773 = vmatpush1.bf16.msra.mxu0 0
          %1774 = vmatprep.subr.bf16.mxu0 0
          %1775 = vmatpush1.bf16.msra.mxu0 0
          %1776 = vmatprep.subr.bf16.mxu0 0
          %1777 = vmatpush1.bf16.msra.mxu0 0
          %1778 = vmatprep.subr.bf16.mxu0 0
          %1779 = vmatpush1.bf16.msra.mxu0 0
          %1780 = vmatprep.subr.bf16.mxu0 0
          %1781 = vmatpush1.bf16.msra.mxu0 0
          %1782 = vmatprep.subr.bf16.mxu0 0
          %1783 = vmatpush1.bf16.msra.mxu0 0
          %1784 = vmatprep.subr.bf16.mxu0 0
          %1785 = vmatpush1.bf16.msra.mxu0 0
          %1786 = vmatprep.mubr.bf16.mxu0 0
          %1787 = vmatmul.mubr.bf16.gmra.mrb[0].mxu0 %v1396
          %v1788 = vpop.f32.mrb[0].mxu0
          %v1789 = vadd.f32 0.0, %v1788
          %v1790 = vpop.f32.mrb[0].mxu0
          %v1791 = vpop.f32.mrb[0].mxu0
          %v1792 = vpop.f32.mrb[0].mxu0
          %1793 = vdwg.mxu0
          %v1810 = vunpack.c.l.b16 %v1450
          %v1811 = vunpack.c.l.b16 %v1451
          %v1812 = vunpack.c.l.b16 %v1452
          %v1813 = vunpack.c.l.b16 %v1453
          %v1814 = vunpack.c.l.b16 %v1454
          %v1815 = vunpack.c.l.b16 %v1455
          %v1816 = vunpack.c.l.b16 %v1456
          %v1817 = vunpack.c.l.b16 %v1457
          %v1818 = vunpack.c.l.b16 %v1458
          %v1819 = vunpack.c.l.b16 %v1459
          %v1820 = vunpack.c.l.b16 %v1460
          %v1821 = vunpack.c.l.b16 %v1461
          %v1822 = vunpack.c.l.b16 %v1462
          %v1823 = vunpack.c.l.b16 %v1463
          %v1824 = vunpack.c.l.b16 %v1464
          %v1825 = vunpack.c.l.b16 %v1465
          %v1826 = vpack.c.b16 %v1811, %v1810
          %v1827 = vpack.c.b16 %v1813, %v1812
          %v1828 = vpack.c.b16 %v1815, %v1814
          %v1829 = vpack.c.b16 %v1817, %v1816
          %v1830 = vpack.c.b16 %v1819, %v1818
          %v1831 = vpack.c.b16 %v1821, %v1820
          %v1832 = vpack.c.b16 %v1823, %v1822
          %v1833 = vpack.c.b16 %v1825, %v1824
          %1842 = vmatprep.subr.bf16.mxu0 0
          %1843 = vmatpush1.bf16.msra.mxu0 %v1826
          %1844 = vmatprep.subr.bf16.mxu0 0
          %1845 = vmatpush1.bf16.msra.mxu0 %v1827
          %1846 = vmatprep.subr.bf16.mxu0 0
          %1847 = vmatpush1.bf16.msra.mxu0 %v1828
          %1848 = vmatprep.subr.bf16.mxu0 0
          %1849 = vmatpush1.bf16.msra.mxu0 %v1829
          %1850 = vmatprep.subr.bf16.mxu0 0
          %1851 = vmatpush1.bf16.msra.mxu0 %v1830
          %1852 = vmatprep.subr.bf16.mxu0 0
          %1853 = vmatpush1.bf16.msra.mxu0 %v1831
          %1854 = vmatprep.subr.bf16.mxu0 0
          %1855 = vmatpush1.bf16.msra.mxu0 %v1832
          %1856 = vmatprep.subr.bf16.mxu0 0
          %1857 = vmatpush1.bf16.msra.mxu0 %v1833
          %1858 = vmatprep.subr.bf16.mxu0 0
          %1859 = vmatpush1.bf16.msra.mxu0 0
          %1860 = vmatprep.subr.bf16.mxu0 0
          %1861 = vmatpush1.bf16.msra.mxu0 0
          %1862 = vmatprep.subr.bf16.mxu0 0
          %1863 = vmatpush1.bf16.msra.mxu0 0
          %1864 = vmatprep.subr.bf16.mxu0 0
          %1865 = vmatpush1.bf16.msra.mxu0 0
          %1866 = vmatprep.subr.bf16.mxu0 0
          %1867 = vmatpush1.bf16.msra.mxu0 0
          %1868 = vmatprep.subr.bf16.mxu0 0
          %1869 = vmatpush1.bf16.msra.mxu0 0
          %1870 = vmatprep.subr.bf16.mxu0 0
          %1871 = vmatpush1.bf16.msra.mxu0 0
          %1872 = vmatprep.subr.bf16.mxu0 0
          %1873 = vmatpush1.bf16.msra.mxu0 0
          %1874 = vmatprep.mubr.bf16.mxu0 0
          %1875 = vmatmul.mubr.bf16.gmra.mrb[0].mxu0 %v1397
          %v1876 = vpop.f32.mrb[0].mxu0
          %v1877 = vadd.f32 0.0, %v1876
          %v1878 = vpop.f32.mrb[0].mxu0
          %v1879 = vpop.f32.mrb[0].mxu0
          %v1880 = vpop.f32.mrb[0].mxu0
          %1881 = vdwg.mxu0
          %v1898 = vunpack.c.l.b16 %v1466
          %v1899 = vunpack.c.l.b16 %v1467
          %v1900 = vunpack.c.l.b16 %v1468
          %v1901 = vunpack.c.l.b16 %v1469
          %v1902 = vunpack.c.l.b16 %v1470
          %v1903 = vunpack.c.l.b16 %v1471
          %v1904 = vunpack.c.l.b16 %v1472
          %v1905 = vunpack.c.l.b16 %v1473
          %v1906 = vunpack.c.l.b16 %v1474
          %v1907 = vunpack.c.l.b16 %v1475
          %v1908 = vunpack.c.l.b16 %v1476
          %v1909 = vunpack.c.l.b16 %v1477
          %v1910 = vunpack.c.l.b16 %v1478
          %v1911 = vunpack.c.l.b16 %v1479
          %v1912 = vunpack.c.l.b16 %v1480
          %v1913 = vunpack.c.l.b16 %v1481
          %v1914 = vpack.c.b16 %v1899, %v1898
          %v1915 = vpack.c.b16 %v1901, %v1900
          %v1916 = vpack.c.b16 %v1903, %v1902
          %v1917 = vpack.c.b16 %v1905, %v1904
          %v1918 = vpack.c.b16 %v1907, %v1906
          %v1919 = vpack.c.b16 %v1909, %v1908
          %v1920 = vpack.c.b16 %v1911, %v1910
          %v1921 = vpack.c.b16 %v1913, %v1912
          %1930 = vmatprep.subr.bf16.mxu0 0
          %1931 = vmatpush1.bf16.msra.mxu0 %v1914
          %1932 = vmatprep.subr.bf16.mxu0 0
          %1933 = vmatpush1.bf16.msra.mxu0 %v1915
          %1934 = vmatprep.subr.bf16.mxu0 0
          %1935 = vmatpush1.bf16.msra.mxu0 %v1916
          %1936 = vmatprep.subr.bf16.mxu0 0
          %1937 = vmatpush1.bf16.msra.mxu0 %v1917
          %1938 = vmatprep.subr.bf16.mxu0 0
          %1939 = vmatpush1.bf16.msra.mxu0 %v1918
          %1940 = vmatprep.subr.bf16.mxu0 0
          %1941 = vmatpush1.bf16.msra.mxu0 %v1919
          %1942 = vmatprep.subr.bf16.mxu0 0
          %1943 = vmatpush1.bf16.msra.mxu0 %v1920
          %1944 = vmatprep.subr.bf16.mxu0 0
          %1945 = vmatpush1.bf16.msra.mxu0 %v1921
          %1946 = vmatprep.subr.bf16.mxu0 0
          %1947 = vmatpush1.bf16.msra.mxu0 0
          %1948 = vmatprep.subr.bf16.mxu0 0
          %1949 = vmatpush1.bf16.msra.mxu0 0
          %1950 = vmatprep.subr.bf16.mxu0 0
          %1951 = vmatpush1.bf16.msra.mxu0 0
          %1952 = vmatprep.subr.bf16.mxu0 0
          %1953 = vmatpush1.bf16.msra.mxu0 0
          %1954 = vmatprep.subr.bf16.mxu0 0
          %1955 = vmatpush1.bf16.msra.mxu0 0
          %1956 = vmatprep.subr.bf16.mxu0 0
          %1957 = vmatpush1.bf16.msra.mxu0 0
          %1958 = vmatprep.subr.bf16.mxu0 0
          %1959 = vmatpush1.bf16.msra.mxu0 0
          %1960 = vmatprep.subr.bf16.mxu0 0
          %1961 = vmatpush1.bf16.msra.mxu0 0
          %1962 = vmatprep.mubr.bf16.mxu0 0
          %1963 = vmatmul.mubr.bf16.gmra.mrb[0].mxu0 %v1398
          %v1964 = vpop.f32.mrb[0].mxu0
          %v1965 = vadd.f32 0.0, %v1964
          %v1966 = vpop.f32.mrb[0].mxu0
          %v1967 = vpop.f32.mrb[0].mxu0
          %v1968 = vpop.f32.mrb[0].mxu0
          %1969 = vdwg.mxu0
          %v1986 = vunpack.c.l.b16 %v1482
          %v1987 = vunpack.c.l.b16 %v1483
          %v1988 = vunpack.c.l.b16 %v1484
          %v1989 = vunpack.c.l.b16 %v1485
          %v1990 = vunpack.c.l.b16 %v1486
          %v1991 = vunpack.c.l.b16 %v1487
          %v1992 = vunpack.c.l.b16 %v1488
          %v1993 = vunpack.c.l.b16 %v1489
          %v1994 = vunpack.c.l.b16 %v1490
          %v1995 = vunpack.c.l.b16 %v1491
          %v1996 = vunpack.c.l.b16 %v1492
          %v1997 = vunpack.c.l.b16 %v1493
          %v1998 = vunpack.c.l.b16 %v1494
          %v1999 = vunpack.c.l.b16 %v1495
          %v2000 = vunpack.c.l.b16 %v1496
          %v2001 = vunpack.c.l.b16 %v1497
          %v2002 = vpack.c.b16 %v1987, %v1986
          %v2003 = vpack.c.b16 %v1989, %v1988
          %v2004 = vpack.c.b16 %v1991, %v1990
          %v2005 = vpack.c.b16 %v1993, %v1992
          %v2006 = vpack.c.b16 %v1995, %v1994
          %v2007 = vpack.c.b16 %v1997, %v1996
          %v2008 = vpack.c.b16 %v1999, %v1998
          %v2009 = vpack.c.b16 %v2001, %v2000
          %2018 = vmatprep.subr.bf16.mxu0 0
          %2019 = vmatpush1.bf16.msra.mxu0 %v2002
          %2020 = vmatprep.subr.bf16.mxu0 0
          %2021 = vmatpush1.bf16.msra.mxu0 %v2003
          %2022 = vmatprep.subr.bf16.mxu0 0
          %2023 = vmatpush1.bf16.msra.mxu0 %v2004
          %2024 = vmatprep.subr.bf16.mxu0 0
          %2025 = vmatpush1.bf16.msra.mxu0 %v2005
          %2026 = vmatprep.subr.bf16.mxu0 0
          %2027 = vmatpush1.bf16.msra.mxu0 %v2006
          %2028 = vmatprep.subr.bf16.mxu0 0
          %2029 = vmatpush1.bf16.msra.mxu0 %v2007
          %2030 = vmatprep.subr.bf16.mxu0 0
          %2031 = vmatpush1.bf16.msra.mxu0 %v2008
          %2032 = vmatprep.subr.bf16.mxu0 0
          %2033 = vmatpush1.bf16.msra.mxu0 %v2009
          %2034 = vmatprep.subr.bf16.mxu0 0
          %2035 = vmatpush1.bf16.msra.mxu0 0
          %2036 = vmatprep.subr.bf16.mxu0 0
          %2037 = vmatpush1.bf16.msra.mxu0 0
          %2038 = vmatprep.subr.bf16.mxu0 0
          %2039 = vmatpush1.bf16.msra.mxu0 0
          %2040 = vmatprep.subr.bf16.mxu0 0
          %2041 = vmatpush1.bf16.msra.mxu0 0
          %2042 = vmatprep.subr.bf16.mxu0 0
          %2043 = vmatpush1.bf16.msra.mxu0 0
          %2044 = vmatprep.subr.bf16.mxu0 0
          %2045 = vmatpush1.bf16.msra.mxu0 0
          %2046 = vmatprep.subr.bf16.mxu0 0
          %2047 = vmatpush1.bf16.msra.mxu0 0
          %2048 = vmatprep.subr.bf16.mxu0 0
          %2049 = vmatpush1.bf16.msra.mxu0 0
          %2050 = vmatprep.mubr.bf16.mxu0 0
          %2051 = vmatmul.mubr.bf16.gmra.mrb[0].mxu0 %v1399
          %v2052 = vpop.f32.mrb[0].mxu0
          %v2053 = vadd.f32 0.0, %v2052
          %v2054 = vpop.f32.mrb[0].mxu0
          %v2055 = vpop.f32.mrb[0].mxu0
          %v2056 = vpop.f32.mrb[0].mxu0
          %2057 = vdwg.mxu0
          %v2074 = vunpack.c.l.b16 %v1498
          %v2075 = vunpack.c.l.b16 %v1499
          %v2076 = vunpack.c.l.b16 %v1500
          %v2077 = vunpack.c.l.b16 %v1501
          %v2078 = vunpack.c.l.b16 %v1502
          %v2079 = vunpack.c.l.b16 %v1503
          %v2080 = vunpack.c.l.b16 %v1504
          %v2081 = vunpack.c.l.b16 %v1505
          %v2082 = vunpack.c.l.b16 %v1506
          %v2083 = vunpack.c.l.b16 %v1507
          %v2084 = vunpack.c.l.b16 %v1508
          %v2085 = vunpack.c.l.b16 %v1509
          %v2086 = vunpack.c.l.b16 %v1510
          %v2087 = vunpack.c.l.b16 %v1511
          %v2088 = vunpack.c.l.b16 %v1512
          %v2089 = vunpack.c.l.b16 %v1513
          %v2090 = vpack.c.b16 %v2075, %v2074
          %v2091 = vpack.c.b16 %v2077, %v2076
          %v2092 = vpack.c.b16 %v2079, %v2078
          %v2093 = vpack.c.b16 %v2081, %v2080
          %v2094 = vpack.c.b16 %v2083, %v2082
          %v2095 = vpack.c.b16 %v2085, %v2084
          %v2096 = vpack.c.b16 %v2087, %v2086
          %v2097 = vpack.c.b16 %v2089, %v2088
          %2106 = vmatprep.subr.bf16.mxu0 0
          %2107 = vmatpush1.bf16.msra.mxu0 %v2090
          %2108 = vmatprep.subr.bf16.mxu0 0
          %2109 = vmatpush1.bf16.msra.mxu0 %v2091
          %2110 = vmatprep.subr.bf16.mxu0 0
          %2111 = vmatpush1.bf16.msra.mxu0 %v2092
          %2112 = vmatprep.subr.bf16.mxu0 0
          %2113 = vmatpush1.bf16.msra.mxu0 %v2093
          %2114 = vmatprep.subr.bf16.mxu0 0
          %2115 = vmatpush1.bf16.msra.mxu0 %v2094
          %2116 = vmatprep.subr.bf16.mxu0 0
          %2117 = vmatpush1.bf16.msra.mxu0 %v2095
          %2118 = vmatprep.subr.bf16.mxu0 0
          %2119 = vmatpush1.bf16.msra.mxu0 %v2096
          %2120 = vmatprep.subr.bf16.mxu0 0
          %2121 = vmatpush1.bf16.msra.mxu0 %v2097
          %2122 = vmatprep.subr.bf16.mxu0 0
          %2123 = vmatpush1.bf16.msra.mxu0 0
          %2124 = vmatprep.subr.bf16.mxu0 0
          %2125 = vmatpush1.bf16.msra.mxu0 0
          %2126 = vmatprep.subr.bf16.mxu0 0
          %2127 = vmatpush1.bf16.msra.mxu0 0
          %2128 = vmatprep.subr.bf16.mxu0 0
          %2129 = vmatpush1.bf16.msra.mxu0 0
          %2130 = vmatprep.subr.bf16.mxu0 0
          %2131 = vmatpush1.bf16.msra.mxu0 0
          %2132 = vmatprep.subr.bf16.mxu0 0
          %2133 = vmatpush1.bf16.msra.mxu0 0
          %2134 = vmatprep.subr.bf16.mxu0 0
          %2135 = vmatpush1.bf16.msra.mxu0 0
          %2136 = vmatprep.subr.bf16.mxu0 0
          %2137 = vmatpush1.bf16.msra.mxu0 0
          %2138 = vmatprep.mubr.bf16.mxu0 0
          %2139 = vmatmul.mubr.bf16.gmra.mrb[0].mxu0 %v1400
          %v2140 = vpop.f32.mrb[0].mxu0
          %v2141 = vadd.f32 0.0, %v2140
          %v2142 = vpop.f32.mrb[0].mxu0
          %v2143 = vpop.f32.mrb[0].mxu0
          %v2144 = vpop.f32.mrb[0].mxu0
          %2145 = vdwg.mxu0
          %v2162 = vunpack.c.l.b16 %v1514
          %v2163 = vunpack.c.l.b16 %v1515
          %v2164 = vunpack.c.l.b16 %v1516
          %v2165 = vunpack.c.l.b16 %v1517
          %v2166 = vunpack.c.l.b16 %v1518
          %v2167 = vunpack.c.l.b16 %v1519
          %v2168 = vunpack.c.l.b16 %v1520
          %v2169 = vunpack.c.l.b16 %v1521
          %v2170 = vunpack.c.l.b16 %v1522
          %v2171 = vunpack.c.l.b16 %v1523
          %v2172 = vunpack.c.l.b16 %v1524
          %v2173 = vunpack.c.l.b16 %v1525
          %v2174 = vunpack.c.l.b16 %v1526
          %v2175 = vunpack.c.l.b16 %v1527
          %v2176 = vunpack.c.l.b16 %v1528
          %v2177 = vunpack.c.l.b16 %v1529
          %v2178 = vpack.c.b16 %v2163, %v2162
          %v2179 = vpack.c.b16 %v2165, %v2164
          %v2180 = vpack.c.b16 %v2167, %v2166
          %v2181 = vpack.c.b16 %v2169, %v2168
          %v2182 = vpack.c.b16 %v2171, %v2170
          %v2183 = vpack.c.b16 %v2173, %v2172
          %v2184 = vpack.c.b16 %v2175, %v2174
          %v2185 = vpack.c.b16 %v2177, %v2176
          %2194 = vmatprep.subr.bf16.mxu0 0
          %2195 = vmatpush1.bf16.msra.mxu0 %v2178
          %2196 = vmatprep.subr.bf16.mxu0 0
          %2197 = vmatpush1.bf16.msra.mxu0 %v2179
          %2198 = vmatprep.subr.bf16.mxu0 0
          %2199 = vmatpush1.bf16.msra.mxu0 %v2180
          %2200 = vmatprep.subr.bf16.mxu0 0
          %2201 = vmatpush1.bf16.msra.mxu0 %v2181
          %2202 = vmatprep.subr.bf16.mxu0 0
          %2203 = vmatpush1.bf16.msra.mxu0 %v2182
          %2204 = vmatprep.subr.bf16.mxu0 0
          %2205 = vmatpush1.bf16.msra.mxu0 %v2183
          %2206 = vmatprep.subr.bf16.mxu0 0
          %2207 = vmatpush1.bf16.msra.mxu0 %v2184
          %2208 = vmatprep.subr.bf16.mxu0 0
          %2209 = vmatpush1.bf16.msra.mxu0 %v2185
          %2210 = vmatprep.subr.bf16.mxu0 0
          %2211 = vmatpush1.bf16.msra.mxu0 0
          %2212 = vmatprep.subr.bf16.mxu0 0
          %2213 = vmatpush1.bf16.msra.mxu0 0
          %2214 = vmatprep.subr.bf16.mxu0 0
          %2215 = vmatpush1.bf16.msra.mxu0 0
          %2216 = vmatprep.subr.bf16.mxu0 0
          %2217 = vmatpush1.bf16.msra.mxu0 0
          %2218 = vmatprep.subr.bf16.mxu0 0
          %2219 = vmatpush1.bf16.msra.mxu0 0
          %2220 = vmatprep.subr.bf16.mxu0 0
          %2221 = vmatpush1.bf16.msra.mxu0 0
          %2222 = vmatprep.subr.bf16.mxu0 0
          %2223 = vmatpush1.bf16.msra.mxu0 0
          %2224 = vmatprep.subr.bf16.mxu0 0
          %2225 = vmatpush1.bf16.msra.mxu0 0
          %2226 = vmatprep.mubr.bf16.mxu0 0
          %2227 = vmatmul.mubr.bf16.gmra.mrb[0].mxu0 %v1401
          %v2228 = vpop.f32.mrb[0].mxu0
          %v2229 = vadd.f32 0.0, %v2228
          %v2230 = vpop.f32.mrb[0].mxu0
          %v2231 = vpop.f32.mrb[0].mxu0
          %v2232 = vpop.f32.mrb[0].mxu0
          %2233 = vdwg.mxu0
          %v2234 = vld [vmem:[%s10] sm:$0x1]
          %v2236 = vlaneseq
          %v2237 = vshrl.u32 %v2236, 7
          %v2238 = vsub.s32 0, %v2237
          %v2239 = vrot.slane %v2234, %v2238
          %2240 = vrot.lane.b32.xlu0 %v2239, 32
          %v2241 = vpop.permute.xlu0 %2240
          %v2243 = vadd.f32 %v633, %v2241
          %v2244 = vxor.u32 %v2243, 2147483648
          %v2245 = vmul.f32 %v2244, 1.442695
          %v2246 = vpow.pop %v2245
          %v2247 = vadd.f32 %v2246, 1.0
          %v2248 = vrcp.pop %v2247
          %v2249 = vmul.f32 1.0, %v2248
          %v2258 = vrot.slane %v1701, 7
          %v2259 = vsel %vm1281, %v2258, %v1613
          %v2260 = vrot.slane %v1789, 6
          %v2261 = vsel %vm1284, %v2260, %v2259
          %v2262 = vrot.slane %v1877, 5
          %v2263 = vsel %vm1287, %v2262, %v2261
          %v2264 = vrot.slane %v1965, 4
          %v2265 = vsel %vm1290, %v2264, %v2263
          %v2266 = vrot.slane %v2053, 3
          %v2267 = vsel %vm1293, %v2266, %v2265
          %v2268 = vrot.slane %v2141, 2
          %v2269 = vsel %vm1296, %v2268, %v2267
          %v2270 = vrot.slane %v2229, 1
          %v2271 = vsel %vm1299, %v2270, %v2269
          %2272 = vrot.lane.b32.xlu0 %v2271, 32
          %v2273 = vpop.permute.xlu0 %2272
          %v2275 = vmul.f32 %v2249, %v2273
          %v2276 = vld [vmem:[%s537] sm:$0xff]
          %v2277 = vadd.f32 %v2276, %v631
          %v2278 = vpack.c.bf16 %v2275, %v2275
          %v2279 = vld [vmem:[%s11] sm:$0xf]
          %v2280 = vld [vmem:[%s11 + $0x4] sm:$0xf]
          %v2281 = vld [vmem:[%s11 + $0x8] sm:$0xf]
          %v2282 = vld [vmem:[%s11 + $0xc] sm:$0xf]
          %2284 = vrot.lane.b32.xlu0 %v2278, 96
          %v2285 = vpop.permute.xlu0 %2284
          %v2290 = vunpack.c.l.b16 %v2279
          %v2291 = vunpack.c.l.b16 %v2280
          %v2292 = vunpack.c.l.b16 %v2281
          %v2293 = vunpack.c.l.b16 %v2282
          %v2294 = vpack.c.b16 %v2291, %v2290
          %v2295 = vpack.c.b16 %v2293, %v2292
          %v2299 = vsel %vm592, %v2285, 0
          %2301 = vmatprep.subr.bf16.mxu0 0
          %2302 = vmatpush1.bf16.msra.mxu0 %v2294
          %2303 = vmatprep.subr.bf16.mxu0 0
          %2304 = vmatpush1.bf16.msra.mxu0 %v2295
          %2305 = vmatprep.subr.bf16.mxu0 0
          %2306 = vmatpush1.bf16.msra.mxu0 0
          %2307 = vmatprep.subr.bf16.mxu0 0
          %2308 = vmatpush1.bf16.msra.mxu0 0
          %2309 = vmatprep.subr.bf16.mxu0 0
          %2310 = vmatpush1.bf16.msra.mxu0 0
          %2311 = vmatprep.subr.bf16.mxu0 0
          %2312 = vmatpush1.bf16.msra.mxu0 0
          %2313 = vmatprep.subr.bf16.mxu0 0
          %2314 = vmatpush1.bf16.msra.mxu0 0
          %2315 = vmatprep.subr.bf16.mxu0 0
          %2316 = vmatpush1.bf16.msra.mxu0 0
          %2317 = vmatprep.subr.bf16.mxu0 0
          %2318 = vmatpush1.bf16.msra.mxu0 0
          %2319 = vmatprep.subr.bf16.mxu0 0
          %2320 = vmatpush1.bf16.msra.mxu0 0
          %2321 = vmatprep.subr.bf16.mxu0 0
          %2322 = vmatpush1.bf16.msra.mxu0 0
          %2323 = vmatprep.subr.bf16.mxu0 0
          %2324 = vmatpush1.bf16.msra.mxu0 0
          %2325 = vmatprep.subr.bf16.mxu0 0
          %2326 = vmatpush1.bf16.msra.mxu0 0
          %2327 = vmatprep.subr.bf16.mxu0 0
          %2328 = vmatpush1.bf16.msra.mxu0 0
          %2329 = vmatprep.subr.bf16.mxu0 0
          %2330 = vmatpush1.bf16.msra.mxu0 0
          %2331 = vmatprep.subr.bf16.mxu0 0
          %2332 = vmatpush1.bf16.msra.mxu0 0
          %2333 = vmatprep.mubr.bf16.mxu0 0
          %2334 = vmatmul.mubr.bf16.gmra.mrb[0].mxu0 %v2299
          %v2335 = vpop.f32.mrb[0].mxu0
          %v2336 = vadd.f32 0.0, %v2335
          %v2337 = vpop.f32.mrb[0].mxu0
          %v2338 = vpop.f32.mrb[0].mxu0
          %v2339 = vpop.f32.mrb[0].mxu0
          %2340 = vdwg.mxu0
          %v2341 = vadd.f32 %v2277, %v2336
          %v2342 = vxor.u32 %v2341, 2147483648
          %v2343 = vmul.f32 %v2342, 1.442695
          %v2344 = vpow.pop %v2343
          %v2345 = vadd.f32 %v2344, 1.0
          %v2346 = vrcp.pop %v2345
          %v2347 = vmul.f32 1.0, %v2346
          %v2348 = vtanh.pop %v2341
          %2350 = vrot.lane.b32.xlu0 %v566, 32
          %v2351 = vpop.permute.xlu0 %2350
          %v2353 = vmul.f32 %v2347, %v2351
          %2355 = vrot.lane.b32.xlu0 %v2348, 64
          %v2356 = vpop.permute.xlu0 %2355
          %v2358 = vmul.f32 %v2347, %v2356
          %2360 = vrot.lane.b32.xlu0 %v2358, 32
          %v2361 = vpop.permute.xlu0 %2360
          %v2363 = vadd.f32 %v2353, %v2361
          %v2364 = vtanh.pop %v2363
          %2366 = vrot.lane.b32.xlu0 %v2364, 64
          %v2367 = vpop.permute.xlu0 %2366
          %v2369 = vmul.f32 %v2347, %v2367
          %v2370 = vld [vmem:[%s541] sm:$0xff]
          %v2371 = vstv %s37
          %vm2372 = vcmp.gt.s32.totalorder %v2370, %v2371
          %v2373 = vsel %vm2372, 1, 0
          %2374 = vset.pattern.permute.xlu0 0
          %2375 = vperm.xlu0 %2374, %v2373
          %v2376 = vpop.permute.xlu0 %2375
          %vm2377 = vcmp.eq.s32.totalorder %v2376, 1
          %2379 = vrot.lane.b32.xlu0 %v565, 96
          %v2380 = vpop.permute.xlu0 %2379
          %v2382 = vsel %vm2377, %v2369, %v2380
          %v2383 = vsel %vm2377, %v2363, %v2351
          %2385 = vrot.lane.b32.xlu0 %v2382, 32
          %v2386 = vpop.permute.xlu0 %2385
          %2388 = vst.msk [vmem:[#allocation2] sm:$0xff] %vm592, %v2386
          %2390 = vrot.lane.b32.xlu0 %v2383, 96
          %v2391 = vpop.permute.xlu0 %2390
          %2393 = vst.msk [vmem:[#allocation3] sm:$0xff] %vm592, %v2391
          %2394 = vst.msk [vmem:[%s509] sm:$0xff] %vm592, %v2386
          %v2403 = vrot.slane %v1387, 7
          %v2404 = vsel %vm1281, %v2403, %v1386
          %v2405 = vrot.slane %v1388, 6
          %v2406 = vsel %vm1284, %v2405, %v2404
          %v2407 = vrot.slane %v1389, 5
          %v2408 = vsel %vm1287, %v2407, %v2406
          %v2409 = vrot.slane %v1390, 4
          %v2410 = vsel %vm1290, %v2409, %v2408
          %v2411 = vrot.slane %v1391, 3
          %v2412 = vsel %vm1293, %v2411, %v2410
          %v2413 = vrot.slane %v1392, 2
          %v2414 = vsel %vm1296, %v2413, %v2412
          %v2415 = vrot.slane %v1393, 1
          %v2416 = vsel %vm1299, %v2415, %v2414
          %v2418 = vsel %vm2377, %v2416, 0.0
          %2419 = vst [vmem:[%s516] sm:$0xff] %v2418
        $region72: #{tpu_custom_call.1} parent=63 // pred_fallthru
          _
        %p2420 = scmp.ge.s32.totalorder %s37, %s560
        // Predicated region
        $region73: #{tpu_custom_call.1} parent=63 // pred_check
          %p2421 = pneg %p2420
        $region74: #{tpu_custom_call.1} parent=63 // pred_check_branch
          %2423 = sbr.rel (%p2421) target = $region76
        $region75: #{tpu_custom_call.1} parent=63 // pred_region
          %v2424 = vld [vmem:[#allocation2] sm:$0xff]
          %vm2425 = vcmask 261120
          %2426 = vst.msk [vmem:[%s509] sm:$0xff] %vm2425, %v2424
          %2427 = vst [vmem:[%s516] sm:$0xff] 0.0
        $region76: #{tpu_custom_call.1} parent=63 // pred_fallthru
          _
        %s2428 = sand.u32 %s317, 1
        %s2429 = scalar_lea.sflag [#allocation7], %s2428
        %s2430 = sand.u32 %s317, 1
        %s2431 = smul.addr %s2430, 8
        %s2432 = scalar_lea.vmem [#allocation6], %s2431
        %s2433 = sand.u32 %s345, 1
        %s2434 = scalar_lea.sflag [#allocation9], %s2433
        %s2435 = sand.u32 %s345, 1
        %s2436 = smul.addr %s2435, 8
        %s2437 = scalar_lea.vmem [#allocation8], %s2436
        // Predicated region
        $region77: #{tpu_custom_call.1} parent=63 // pred_check
          %p2438 = pneg %p327
        $region78: #{tpu_custom_call.1} parent=63 // pred_check_branch
          %2440 = sbr.rel (%p2438) target = $region80
        $region79: #{tpu_custom_call.1} parent=63 // pred_region
          %s2442 = ssub.s32 128, 128
          %2443 = vsyncadd %s2429, %s2442
          %s2444 = sadd.s32 %s36, %s37
          %s2445 = smul.addr %s2444, 128
          %s2446 = scalar_lea.hbm %s12, %s2445
          %s2448 = sshll.u32 %s2432, 4
          %s2449 = int_to_ptr.vmem [resolvable:$true] %s2448
          %2451 = dma.vmem_to_hbm [thread:$0]  %s2449, 128, %s2446, %s2429
        $region80: #{tpu_custom_call.1} parent=63 // pred_fallthru
          _
        // Predicated region
        $region81: #{tpu_custom_call.1} parent=63 // pred_check
          %p2452 = pneg %p355
        $region82: #{tpu_custom_call.1} parent=63 // pred_check_branch
          %2454 = sbr.rel (%p2452) target = $region84
        $region83: #{tpu_custom_call.1} parent=63 // pred_region
          %s2456 = ssub.s32 128, 128
          %2457 = vsyncadd %s2434, %s2456
          %s2458 = sadd.s32 %s36, %s37
          %s2459 = smul.addr %s2458, 128
          %s2460 = scalar_lea.hbm %s13, %s2459
          %s2462 = sshll.u32 %s2437, 4
          %s2463 = int_to_ptr.vmem [resolvable:$true] %s2462
          %2465 = dma.vmem_to_hbm [thread:$0]  %s2463, 128, %s2460, %s2434
        $region84: #{tpu_custom_call.1} parent=63 // pred_fallthru
          _
      $region64: #{tpu_custom_call.1} parent=5 // pred_fallthru
        _
      %p2466 = scmp.le.s32.totalorder 2, %s27
      // Predicated region
      $region85: #{tpu_custom_call.1} parent=5 // pred_check
        %p2467 = pneg %p2466
      $region86: #{tpu_custom_call.1} parent=5 // pred_check_branch
        %2469 = sbr.rel (%p2467) target = $region88
      $region87: #{tpu_custom_call.1} parent=5 // pred_region
        %s2470 = ssub.s32 %s27, 2
        // Predicated region
        $region89: #{tpu_custom_call.1} parent=87 // pred_check
          %p2471 = pneg %p333
        $region90: #{tpu_custom_call.1} parent=87 // pred_check_branch
          %2473 = sbr.rel (%p2471) target = $region92
        $region91: #{tpu_custom_call.1} parent=87 // pred_region
          %s2474 = sand.u32 %s318, 1
          %s2475 = scalar_lea.sflag [#allocation7], %s2474
          %s2476 = sand.u32 %s318, 1
          %s2477 = smul.addr %s2476, 8
          %s2478 = scalar_lea.vmem [#allocation6], %s2477
          %2479 = dma.done %s2475, 128
        $region92: #{tpu_custom_call.1} parent=87 // pred_fallthru
          _
        // Predicated region
        $region93: #{tpu_custom_call.1} parent=87 // pred_check
          %p2480 = pneg %p361
        $region94: #{tpu_custom_call.1} parent=87 // pred_check_branch
          %2482 = sbr.rel (%p2480) target = $region96
        $region95: #{tpu_custom_call.1} parent=87 // pred_region
          %s2483 = sand.u32 %s346, 1
          %s2484 = scalar_lea.sflag [#allocation9], %s2483
          %s2485 = sand.u32 %s346, 1
          %s2486 = smul.addr %s2485, 8
          %s2487 = scalar_lea.vmem [#allocation8], %s2486
          %2488 = dma.done %s2484, 128
        $region96: #{tpu_custom_call.1} parent=87 // pred_fallthru
          _
      $region88: #{tpu_custom_call.1} parent=5 // pred_fallthru
        _
    $region6: #{tpu_custom_call.1} parent=1 // loop_footer
      %s31 = sadd.s32 1, %s27
    $region7: #{tpu_custom_call.1} parent=1 // loop_footer_branch
      %26 = sbr.rel target = $region3
    $region8: #{tpu_custom_call.1} parent=1 // loop_exit
      _
    %2489 = vsyncpa [#allocation7], 1
    %s2490 = scalar_lea.sflag [#allocation7], 1
    %2491 = vsyncpa %s2490, 1
    %2492 = vsyncpa [#allocation9], 1
    %s2493 = scalar_lea.sflag [#allocation9], 1
    %2494 = vsyncpa %s2493, 1

</llo_original>
